<compile_context>
chip_gen: v5e
topology: v5e:2x2
jax: 0.10.0
libtpu: 0.0.40
codegen_flags: <defaults>
</compile_context>

<pallas_src>
import math
from functools import partial

import jax
import jax.numpy as jnp
from jax import lax
from jax.experimental import pallas as pl
from jax.experimental.pallas import tpu as pltpu

EPS = 1e-6
LOG_2PI = math.log(2.0 * math.pi)
INV_SQRT2 = 1.0 / math.sqrt(2.0)

_ALIGN = 1024        # 8 sublanes * 128 lanes  -> batch tile granule
_MAX_TILE = 16384    # per-step batch tile cap (VMEM use stays at a few MB)


def cdf_flow_kernel(x_ref, y_ref, hnet_ref, mix_ref, out_ref):
    # x_ref  : (nx, 8, tn8)  VMEM   batch folded onto (sublane, lane)
    # y_ref  : (8, tn8)      VMEM
    # hnet_ref: (H*(nx+2)+1,) SMEM  flat [W1[:,h], b1[h], W2[h]] per h, then b2
    # mix_ref : (K*5+1,)      SMEM  flat [mu, 1/sigma, 0.5*w, w, -(log sigma+0.5*log2pi)]
    #                               per k, then sum_k 0.5*w_k
    # out_ref: (4, 8, tn8)   VMEM   rows: log_pyx, noise, log_pe, log_det
    nx = x_ref.shape[0]
    stride = nx + 2
    H = (hnet_ref.shape[0] - 1) // stride
    K = (mix_ref.shape[0] - 1) // 5

    y = y_ref[...]                                   # (8, tn8) f32, dense

    # ---------------- h_net: Linear(nx,H) -> ReLU -> Dropout(eval: id) -> Linear(H,1)
    # scalar coefficients (SMEM) * dense slabs; no MXU for these degenerate shapes.
    xs = [x_ref[i] for i in range(nx)]               # hoist VMEM feature loads
    hx = jnp.zeros_like(y) + hnet_ref[H * stride]    # start from b2
    for h in range(H):
        pre = hnet_ref[h * stride + nx] + hnet_ref[h * stride] * xs[0]
        for i in range(1, nx):
            pre = pre + hnet_ref[h * stride + i] * xs[i]
        hx = hx + hnet_ref[h * stride + nx + 1] * jnp.maximum(pre, 0.0)

    # ---------------- g_inverse: mixture-of-Gaussians CDF (dense per-component slabs)
    t_acc = jnp.zeros_like(y) + mix_ref[5 * K]       # sum_k 0.5*w_k  (== 0.5*sum softmax)
    dt_acc = jnp.zeros_like(y)
    for k in range(K):
        mu_k = mix_ref[5 * k + 0]
        inv_sigma_k = mix_ref[5 * k + 1]
        half_w_k = mix_ref[5 * k + 2]
        w_k = mix_ref[5 * k + 3]
        c_k = mix_ref[5 * k + 4]                     # -(log sigma_k + 0.5*log 2pi)
        z = (y - mu_k) * inv_sigma_k
        t_acc = t_acc + half_w_k * lax.erf(z * INV_SQRT2)
        lp = c_k - 0.5 * (z * z)                     # component log-pdf (== reference)
        dt_acc = dt_acc + w_k * jnp.exp(jnp.clip(lp, -12.0, 12.0))
    t = jnp.clip(t_acc, EPS, 1.0 - EPS)

    # ---------------- flow forward -------------------------------------------
    lt = jnp.log(t)
    l1t = jnp.log(1.0 - t)
    noise = (lt - l1t) - hx                          # sigmoid^{-1}(t) - h_net(X)
    log_pe = -0.5 * (noise * noise) - 0.5 * LOG_2PI  # Normal(0,1).log_prob
    # dt_acc > 0 and t in (eps, 1-eps), so the reference abs() is redundant.
    log_det = jnp.log(dt_acc) - (lt + l1t)           # log|1/(t(1-t))| + log|dt/dy|

    # four dense, lane-full row-block stores (no in-kernel concatenate / sublane pack)
    out_ref[0] = log_pe + log_det                    # log_pyx
    out_ref[1] = noise
    out_ref[2] = log_pe
    out_ref[3] = log_det


def _pick_tile(n):
    """tile_n: multiple of 1024, <= 16384, minimal padding, even #steps when >1 (v7x)."""
    n_blocks = -(-n // _ALIGN)
    if n_blocks <= 1:
        return _ALIGN
    steps = max(2, -(-(n_blocks * _ALIGN) // _MAX_TILE))
    steps += steps % 2                               # even step count -> balanced dual-TC
    tile_blocks = -(-n_blocks // steps)
    return tile_blocks * _ALIGN


@partial(jax.jit, static_argnames=("tile_n",))
def cdf_flow_forward(X, Y, params, tile_n=None):
    """X: (n, nx), Y: (n, 1) -> (log_pyx, noise, log_pe, log_det), each (n, 1) f32."""
    n, nx = X.shape
    W1, b1, W2, b2, w_logit, mu, log_sigma = params
    H = W1.shape[1]
    K = w_logit.reshape(-1).shape[0]

    # ---- hoisted, loop-invariant parameter math (tiny, pure XLA) ----
    w = jax.nn.softmax(w_logit.reshape(-1).astype(jnp.float32))
    sigma = jnp.maximum(jnp.exp(log_sigma.reshape(-1).astype(jnp.float32)), 1e-6)
    inv_sigma = 1.0 / sigma
    c = -(jnp.log(sigma) + 0.5 * LOG_2PI)
    mix_flat = jnp.concatenate([
        jnp.stack([mu.reshape(-1).astype(jnp.float32), inv_sigma, 0.5 * w, w, c],
                  axis=1).reshape(-1),
        0.5 * jnp.sum(w, keepdims=True),
    ])                                                             # (K*5 + 1,)

    hnet_core = jnp.concatenate(
        [W1.T.astype(jnp.float32),                                 # (H, nx)
         b1.reshape(H, 1).astype(jnp.float32),                     # (H, 1)
         W2.reshape(H, 1).astype(jnp.float32)], axis=1)            # (H, nx+2)
    hnet_flat = jnp.concatenate(
        [hnet_core.reshape(-1),
         jnp.reshape(b2, (1,)).astype(jnp.float32)])               # (H*(nx+2) + 1,)

    # ---- tile selection + batch folding onto (8, n_pad/8) ----
    if tile_n is None:
        tile_n = _pick_tile(n)
    assert tile_n % _ALIGN == 0, "tile_n must be a multiple of 1024 (8 sublanes x 128 lanes)"
    n_pad = -(-n // tile_n) * tile_n
    tn8 = tile_n // 8
    grid = (n_pad // tile_n,)

    Xf = X.astype(jnp.float32).T.reshape(nx, n)
    Yf = Y.astype(jnp.float32).reshape(1, n)
    if n_pad != n:
        Xf = jnp.pad(Xf, ((0, 0), (0, n_pad - n)))
        Yf = jnp.pad(Yf, ((0, 0), (0, n_pad - n)))
    Xf = Xf.reshape(nx, 8, n_pad // 8)                             # contiguous fold
    Yf = Yf.reshape(8, n_pad // 8)

    out = pl.pallas_call(
        cdf_flow_kernel,
        grid_spec=pltpu.PrefetchScalarGridSpec(
            num_scalar_prefetch=0,
            grid=grid,
            in_specs=[
                pl.BlockSpec((nx, 8, tn8), lambda i: (0, 0, i)),          # folded X
                pl.BlockSpec((8, tn8), lambda i: (0, i)),                 # folded Y
                pl.BlockSpec(memory_space=pltpu.MemorySpace.SMEM),        # h_net params
                pl.BlockSpec(memory_space=pltpu.MemorySpace.SMEM),        # mixture params
            ],
            out_specs=pl.BlockSpec((4, 8, tn8), lambda i: (0, 0, i)),
        ),
        out_shape=jax.ShapeDtypeStruct((4, 8, n_pad // 8), jnp.float32),
        compiler_params=pltpu.CompilerParams(dimension_semantics=("parallel",)),
    )(Xf, Yf, hnet_flat, mix_flat)

    # contiguous unfold + split (fused into this jit; no separate HBM round trips)
    slab = out.reshape(4, n_pad)[:, :n]
    return (slab[0].reshape(n, 1), slab[1].reshape(n, 1),
            slab[2].reshape(n, 1), slab[3].reshape(n, 1))


def cdf_flow_reference(X, Y, params):
    """Pure-JAX faithful translation of the PyTorch forward (eval mode)."""
    W1, b1, W2, b2, w_logit, mu, log_sigma = params
    h = jnp.maximum(X @ W1 + b1, 0.0)
    hx = h @ W2 + b2
    w = jax.nn.softmax(w_logit, axis=-1)
    sigma = jnp.maximum(jnp.exp(log_sigma), 1e-6)
    z = (Y - mu) / sigma
    cdf = 0.5 * (1.0 + lax.erf(z * INV_SQRT2))
    t = jnp.clip(jnp.sum(w * cdf, axis=1, keepdims=True), EPS, 1.0 - EPS)
    sig_inv = -jnp.log(1.0 / t - 1.0)
    noise = sig_inv - hx
    log_pe = -0.5 * noise**2 - 0.5 * LOG_2PI
    lp = -0.5 * z**2 - jnp.log(sigma) - 0.5 * LOG_2PI
    pdf = jnp.exp(jnp.clip(lp, -12.0, 12.0))
    dt_dy = jnp.abs(jnp.sum(w * pdf, axis=1, keepdims=True))
    dgi_dt = jnp.abs(1.0 / (t * (1.0 - t)))
    log_det = jnp.log(dgi_dt) + jnp.log(dt_dy)
    return log_pe + log_det, noise, log_pe, log_det


if __name__ == "__main__":
    # Module config: nx=1, hidden_sizes=[32], k=4, base_dist='normal'
    NX, H, K = 1, 32, 4

    key = jax.random.PRNGKey(0)
    ks = jax.random.split(key, 10)

    W1 = jax.random.normal(ks[0], (NX, H), jnp.float32) * 0.5
    b1 = jax.random.normal(ks[1], (1, H), jnp.float32) * 0.1
    W2 = jax.random.normal(ks[2], (H, 1), jnp.float32) * 0.5
    b2 = jax.random.normal(ks[3], (1, 1), jnp.float32) * 0.1
    w_logit = jax.random.normal(ks[4], (1, K), jnp.float32)
    mu = jax.random.normal(ks[5], (1, K), jnp.float32)
    log_sigma = jax.random.normal(ks[6], (1, K), jnp.float32)
    params = (W1, b1, W2, b2, w_logit, mu, log_sigma)

    ok = True
    for N in (256, 200):  # 200 exercises the padded-tail path
        X = jax.random.normal(ks[7], (N, NX), jnp.float32)
        Y = jax.random.normal(ks[8], (N, 1), jnp.float32)

        outs = cdf_flow_forward(X, Y, params)
        outs = jax.block_until_ready(outs)

        refs = cdf_flow_reference(X, Y, params)
        for o, r in zip(outs, refs):
            assert o.shape == (N, 1)
            if not jnp.allclose(o, r, rtol=2e-3, atol=2e-3):
                ok = False

    assert ok, "mismatch vs reference"
    print("KERNEL_OK")
</pallas_src>

<mosaic_0001>
module attributes {stable_mosaic.version = 11 : i64} {
  func.func @cdf_flow_kernel(%arg0: i32, %arg1: memref<1x8x128xf32, #tpu.memory_space<vmem>>, %arg2: memref<8x128xf32, #tpu.memory_space<vmem>>, %arg3: memref<97xf32, #tpu.memory_space<smem>>, %arg4: memref<21xf32, #tpu.memory_space<smem>>, %arg5: memref<4x8x128xf32, #tpu.memory_space<vmem>>) attributes {dimension_semantics = [#tpu.dimension_semantics<parallel>], iteration_bounds = array<i64: 1>, scalar_prefetch = 0 : i64, scratch_operands = 0 : i64, tpu.core_type = #tpu.core_type<tc>, window_params = [{transform_indices = @transform_0, window_bounds = array<i64: 1, 8, 128>}, {transform_indices = @transform_1, window_bounds = array<i64: 8, 128>}, {transform_indices = @transform_2, window_bounds = array<i64: 97>}, {transform_indices = @transform_3, window_bounds = array<i64: 21>}, {transform_indices = @transform_4, window_bounds = array<i64: 4, 8, 128>}]} {
    %c0 = arith.constant 0 : index
    %c0_0 = arith.constant 0 : index
    %0 = vector.load %arg2[%c0, %c0_0] : memref<8x128xf32, #tpu.memory_space<vmem>>, vector<8x128xf32>
    %c0_1 = arith.constant 0 : index
    %c0_2 = arith.constant 0 : index
    %c0_3 = arith.constant 0 : index
    %1 = vector.load %arg1[%c0_1, %c0_2, %c0_3] : memref<1x8x128xf32, #tpu.memory_space<vmem>>, vector<1x8x128xf32>
    %2 = vector.shape_cast %1 : vector<1x8x128xf32> to vector<8x128xf32>
    %cst = arith.constant 0.000000e+00 : f32
    %3 = vector.broadcast %cst : f32 to vector<8x128xf32>
    %c96 = arith.constant 96 : index
    %4 = memref.load %arg3[%c96] : memref<97xf32, #tpu.memory_space<smem>>
    %5 = vector.broadcast %4 : f32 to vector<8x128xf32>
    %6 = arith.addf %3, %5 : vector<8x128xf32>
    %c1 = arith.constant 1 : index
    %7 = memref.load %arg3[%c1] : memref<97xf32, #tpu.memory_space<smem>>
    %c0_4 = arith.constant 0 : index
    %8 = memref.load %arg3[%c0_4] : memref<97xf32, #tpu.memory_space<smem>>
    %9 = vector.broadcast %8 : f32 to vector<8x128xf32>
    %10 = arith.mulf %9, %2 : vector<8x128xf32>
    %11 = vector.broadcast %7 : f32 to vector<8x128xf32>
    %12 = arith.addf %11, %10 : vector<8x128xf32>
    %c2 = arith.constant 2 : index
    %13 = memref.load %arg3[%c2] : memref<97xf32, #tpu.memory_space<smem>>
    %cst_5 = arith.constant 0.000000e+00 : f32
    %14 = vector.broadcast %cst_5 : f32 to vector<8x128xf32>
    %15 = arith.maximumf %12, %14 : vector<8x128xf32>
    %16 = vector.broadcast %13 : f32 to vector<8x128xf32>
    %17 = arith.mulf %16, %15 : vector<8x128xf32>
    %18 = arith.addf %6, %17 : vector<8x128xf32>
    %c4 = arith.constant 4 : index
    %19 = memref.load %arg3[%c4] : memref<97xf32, #tpu.memory_space<smem>>
    %c3 = arith.constant 3 : index
    %20 = memref.load %arg3[%c3] : memref<97xf32, #tpu.memory_space<smem>>
    %21 = vector.broadcast %20 : f32 to vector<8x128xf32>
    %22 = arith.mulf %21, %2 : vector<8x128xf32>
    %23 = vector.broadcast %19 : f32 to vector<8x128xf32>
    %24 = arith.addf %23, %22 : vector<8x128xf32>
    %c5 = arith.constant 5 : index
    %25 = memref.load %arg3[%c5] : memref<97xf32, #tpu.memory_space<smem>>
    %cst_6 = arith.constant 0.000000e+00 : f32
    %26 = vector.broadcast %cst_6 : f32 to vector<8x128xf32>
    %27 = arith.maximumf %24, %26 : vector<8x128xf32>
    %28 = vector.broadcast %25 : f32 to vector<8x128xf32>
    %29 = arith.mulf %28, %27 : vector<8x128xf32>
    %30 = arith.addf %18, %29 : vector<8x128xf32>
    %c7 = arith.constant 7 : index
    %31 = memref.load %arg3[%c7] : memref<97xf32, #tpu.memory_space<smem>>
    %c6 = arith.constant 6 : index
    %32 = memref.load %arg3[%c6] : memref<97xf32, #tpu.memory_space<smem>>
    %33 = vector.broadcast %32 : f32 to vector<8x128xf32>
    %34 = arith.mulf %33, %2 : vector<8x128xf32>
    %35 = vector.broadcast %31 : f32 to vector<8x128xf32>
    %36 = arith.addf %35, %34 : vector<8x128xf32>
    %c8 = arith.constant 8 : index
    %37 = memref.load %arg3[%c8] : memref<97xf32, #tpu.memory_space<smem>>
    %cst_7 = arith.constant 0.000000e+00 : f32
    %38 = vector.broadcast %cst_7 : f32 to vector<8x128xf32>
    %39 = arith.maximumf %36, %38 : vector<8x128xf32>
    %40 = vector.broadcast %37 : f32 to vector<8x128xf32>
    %41 = arith.mulf %40, %39 : vector<8x128xf32>
    %42 = arith.addf %30, %41 : vector<8x128xf32>
    %c10 = arith.constant 10 : index
    %43 = memref.load %arg3[%c10] : memref<97xf32, #tpu.memory_space<smem>>
    %c9 = arith.constant 9 : index
    %44 = memref.load %arg3[%c9] : memref<97xf32, #tpu.memory_space<smem>>
    %45 = vector.broadcast %44 : f32 to vector<8x128xf32>
    %46 = arith.mulf %45, %2 : vector<8x128xf32>
    %47 = vector.broadcast %43 : f32 to vector<8x128xf32>
    %48 = arith.addf %47, %46 : vector<8x128xf32>
    %c11 = arith.constant 11 : index
    %49 = memref.load %arg3[%c11] : memref<97xf32, #tpu.memory_space<smem>>
    %cst_8 = arith.constant 0.000000e+00 : f32
    %50 = vector.broadcast %cst_8 : f32 to vector<8x128xf32>
    %51 = arith.maximumf %48, %50 : vector<8x128xf32>
    %52 = vector.broadcast %49 : f32 to vector<8x128xf32>
    %53 = arith.mulf %52, %51 : vector<8x128xf32>
    %54 = arith.addf %42, %53 : vector<8x128xf32>
    %c13 = arith.constant 13 : index
    %55 = memref.load %arg3[%c13] : memref<97xf32, #tpu.memory_space<smem>>
    %c12 = arith.constant 12 : index
    %56 = memref.load %arg3[%c12] : memref<97xf32, #tpu.memory_space<smem>>
    %57 = vector.broadcast %56 : f32 to vector<8x128xf32>
    %58 = arith.mulf %57, %2 : vector<8x128xf32>
    %59 = vector.broadcast %55 : f32 to vector<8x128xf32>
    %60 = arith.addf %59, %58 : vector<8x128xf32>
    %c14 = arith.constant 14 : index
    %61 = memref.load %arg3[%c14] : memref<97xf32, #tpu.memory_space<smem>>
    %cst_9 = arith.constant 0.000000e+00 : f32
    %62 = vector.broadcast %cst_9 : f32 to vector<8x128xf32>
    %63 = arith.maximumf %60, %62 : vector<8x128xf32>
    %64 = vector.broadcast %61 : f32 to vector<8x128xf32>
    %65 = arith.mulf %64, %63 : vector<8x128xf32>
    %66 = arith.addf %54, %65 : vector<8x128xf32>
    %c16 = arith.constant 16 : index
    %67 = memref.load %arg3[%c16] : memref<97xf32, #tpu.memory_space<smem>>
    %c15 = arith.constant 15 : index
    %68 = memref.load %arg3[%c15] : memref<97xf32, #tpu.memory_space<smem>>
    %69 = vector.broadcast %68 : f32 to vector<8x128xf32>
    %70 = arith.mulf %69, %2 : vector<8x128xf32>
    %71 = vector.broadcast %67 : f32 to vector<8x128xf32>
    %72 = arith.addf %71, %70 : vector<8x128xf32>
    %c17 = arith.constant 17 : index
    %73 = memref.load %arg3[%c17] : memref<97xf32, #tpu.memory_space<smem>>
    %cst_10 = arith.constant 0.000000e+00 : f32
    %74 = vector.broadcast %cst_10 : f32 to vector<8x128xf32>
    %75 = arith.maximumf %72, %74 : vector<8x128xf32>
    %76 = vector.broadcast %73 : f32 to vector<8x128xf32>
    %77 = arith.mulf %76, %75 : vector<8x128xf32>
    %78 = arith.addf %66, %77 : vector<8x128xf32>
    %c19 = arith.constant 19 : index
    %79 = memref.load %arg3[%c19] : memref<97xf32, #tpu.memory_space<smem>>
    %c18 = arith.constant 18 : index
    %80 = memref.load %arg3[%c18] : memref<97xf32, #tpu.memory_space<smem>>
    %81 = vector.broadcast %80 : f32 to vector<8x128xf32>
    %82 = arith.mulf %81, %2 : vector<8x128xf32>
    %83 = vector.broadcast %79 : f32 to vector<8x128xf32>
    %84 = arith.addf %83, %82 : vector<8x128xf32>
    %c20 = arith.constant 20 : index
    %85 = memref.load %arg3[%c20] : memref<97xf32, #tpu.memory_space<smem>>
    %cst_11 = arith.constant 0.000000e+00 : f32
    %86 = vector.broadcast %cst_11 : f32 to vector<8x128xf32>
    %87 = arith.maximumf %84, %86 : vector<8x128xf32>
    %88 = vector.broadcast %85 : f32 to vector<8x128xf32>
    %89 = arith.mulf %88, %87 : vector<8x128xf32>
    %90 = arith.addf %78, %89 : vector<8x128xf32>
    %c22 = arith.constant 22 : index
    %91 = memref.load %arg3[%c22] : memref<97xf32, #tpu.memory_space<smem>>
    %c21 = arith.constant 21 : index
    %92 = memref.load %arg3[%c21] : memref<97xf32, #tpu.memory_space<smem>>
    %93 = vector.broadcast %92 : f32 to vector<8x128xf32>
    %94 = arith.mulf %93, %2 : vector<8x128xf32>
    %95 = vector.broadcast %91 : f32 to vector<8x128xf32>
    %96 = arith.addf %95, %94 : vector<8x128xf32>
    %c23 = arith.constant 23 : index
    %97 = memref.load %arg3[%c23] : memref<97xf32, #tpu.memory_space<smem>>
    %cst_12 = arith.constant 0.000000e+00 : f32
    %98 = vector.broadcast %cst_12 : f32 to vector<8x128xf32>
    %99 = arith.maximumf %96, %98 : vector<8x128xf32>
    %100 = vector.broadcast %97 : f32 to vector<8x128xf32>
    %101 = arith.mulf %100, %99 : vector<8x128xf32>
    %102 = arith.addf %90, %101 : vector<8x128xf32>
    %c25 = arith.constant 25 : index
    %103 = memref.load %arg3[%c25] : memref<97xf32, #tpu.memory_space<smem>>
    %c24 = arith.constant 24 : index
    %104 = memref.load %arg3[%c24] : memref<97xf32, #tpu.memory_space<smem>>
    %105 = vector.broadcast %104 : f32 to vector<8x128xf32>
    %106 = arith.mulf %105, %2 : vector<8x128xf32>
    %107 = vector.broadcast %103 : f32 to vector<8x128xf32>
    %108 = arith.addf %107, %106 : vector<8x128xf32>
    %c26 = arith.constant 26 : index
    %109 = memref.load %arg3[%c26] : memref<97xf32, #tpu.memory_space<smem>>
    %cst_13 = arith.constant 0.000000e+00 : f32
    %110 = vector.broadcast %cst_13 : f32 to vector<8x128xf32>
    %111 = arith.maximumf %108, %110 : vector<8x128xf32>
    %112 = vector.broadcast %109 : f32 to vector<8x128xf32>
    %113 = arith.mulf %112, %111 : vector<8x128xf32>
    %114 = arith.addf %102, %113 : vector<8x128xf32>
    %c28 = arith.constant 28 : index
    %115 = memref.load %arg3[%c28] : memref<97xf32, #tpu.memory_space<smem>>
    %c27 = arith.constant 27 : index
    %116 = memref.load %arg3[%c27] : memref<97xf32, #tpu.memory_space<smem>>
    %117 = vector.broadcast %116 : f32 to vector<8x128xf32>
    %118 = arith.mulf %117, %2 : vector<8x128xf32>
    %119 = vector.broadcast %115 : f32 to vector<8x128xf32>
    %120 = arith.addf %119, %118 : vector<8x128xf32>
    %c29 = arith.constant 29 : index
    %121 = memref.load %arg3[%c29] : memref<97xf32, #tpu.memory_space<smem>>
    %cst_14 = arith.constant 0.000000e+00 : f32
    %122 = vector.broadcast %cst_14 : f32 to vector<8x128xf32>
    %123 = arith.maximumf %120, %122 : vector<8x128xf32>
    %124 = vector.broadcast %121 : f32 to vector<8x128xf32>
    %125 = arith.mulf %124, %123 : vector<8x128xf32>
    %126 = arith.addf %114, %125 : vector<8x128xf32>
    %c31 = arith.constant 31 : index
    %127 = memref.load %arg3[%c31] : memref<97xf32, #tpu.memory_space<smem>>
    %c30 = arith.constant 30 : index
    %128 = memref.load %arg3[%c30] : memref<97xf32, #tpu.memory_space<smem>>
    %129 = vector.broadcast %128 : f32 to vector<8x128xf32>
    %130 = arith.mulf %129, %2 : vector<8x128xf32>
    %131 = vector.broadcast %127 : f32 to vector<8x128xf32>
    %132 = arith.addf %131, %130 : vector<8x128xf32>
    %c32 = arith.constant 32 : index
    %133 = memref.load %arg3[%c32] : memref<97xf32, #tpu.memory_space<smem>>
    %cst_15 = arith.constant 0.000000e+00 : f32
    %134 = vector.broadcast %cst_15 : f32 to vector<8x128xf32>
    %135 = arith.maximumf %132, %134 : vector<8x128xf32>
    %136 = vector.broadcast %133 : f32 to vector<8x128xf32>
    %137 = arith.mulf %136, %135 : vector<8x128xf32>
    %138 = arith.addf %126, %137 : vector<8x128xf32>
    %c34 = arith.constant 34 : index
    %139 = memref.load %arg3[%c34] : memref<97xf32, #tpu.memory_space<smem>>
    %c33 = arith.constant 33 : index
    %140 = memref.load %arg3[%c33] : memref<97xf32, #tpu.memory_space<smem>>
    %141 = vector.broadcast %140 : f32 to vector<8x128xf32>
    %142 = arith.mulf %141, %2 : vector<8x128xf32>
    %143 = vector.broadcast %139 : f32 to vector<8x128xf32>
    %144 = arith.addf %143, %142 : vector<8x128xf32>
    %c35 = arith.constant 35 : index
    %145 = memref.load %arg3[%c35] : memref<97xf32, #tpu.memory_space<smem>>
    %cst_16 = arith.constant 0.000000e+00 : f32
    %146 = vector.broadcast %cst_16 : f32 to vector<8x128xf32>
    %147 = arith.maximumf %144, %146 : vector<8x128xf32>
    %148 = vector.broadcast %145 : f32 to vector<8x128xf32>
    %149 = arith.mulf %148, %147 : vector<8x128xf32>
    %150 = arith.addf %138, %149 : vector<8x128xf32>
    %c37 = arith.constant 37 : index
    %151 = memref.load %arg3[%c37] : memref<97xf32, #tpu.memory_space<smem>>
    %c36 = arith.constant 36 : index
    %152 = memref.load %arg3[%c36] : memref<97xf32, #tpu.memory_space<smem>>
    %153 = vector.broadcast %152 : f32 to vector<8x128xf32>
    %154 = arith.mulf %153, %2 : vector<8x128xf32>
    %155 = vector.broadcast %151 : f32 to vector<8x128xf32>
    %156 = arith.addf %155, %154 : vector<8x128xf32>
    %c38 = arith.constant 38 : index
    %157 = memref.load %arg3[%c38] : memref<97xf32, #tpu.memory_space<smem>>
    %cst_17 = arith.constant 0.000000e+00 : f32
    %158 = vector.broadcast %cst_17 : f32 to vector<8x128xf32>
    %159 = arith.maximumf %156, %158 : vector<8x128xf32>
    %160 = vector.broadcast %157 : f32 to vector<8x128xf32>
    %161 = arith.mulf %160, %159 : vector<8x128xf32>
    %162 = arith.addf %150, %161 : vector<8x128xf32>
    %c40 = arith.constant 40 : index
    %163 = memref.load %arg3[%c40] : memref<97xf32, #tpu.memory_space<smem>>
    %c39 = arith.constant 39 : index
    %164 = memref.load %arg3[%c39] : memref<97xf32, #tpu.memory_space<smem>>
    %165 = vector.broadcast %164 : f32 to vector<8x128xf32>
    %166 = arith.mulf %165, %2 : vector<8x128xf32>
    %167 = vector.broadcast %163 : f32 to vector<8x128xf32>
    %168 = arith.addf %167, %166 : vector<8x128xf32>
    %c41 = arith.constant 41 : index
    %169 = memref.load %arg3[%c41] : memref<97xf32, #tpu.memory_space<smem>>
    %cst_18 = arith.constant 0.000000e+00 : f32
    %170 = vector.broadcast %cst_18 : f32 to vector<8x128xf32>
    %171 = arith.maximumf %168, %170 : vector<8x128xf32>
    %172 = vector.broadcast %169 : f32 to vector<8x128xf32>
    %173 = arith.mulf %172, %171 : vector<8x128xf32>
    %174 = arith.addf %162, %173 : vector<8x128xf32>
    %c43 = arith.constant 43 : index
    %175 = memref.load %arg3[%c43] : memref<97xf32, #tpu.memory_space<smem>>
    %c42 = arith.constant 42 : index
    %176 = memref.load %arg3[%c42] : memref<97xf32, #tpu.memory_space<smem>>
    %177 = vector.broadcast %176 : f32 to vector<8x128xf32>
    %178 = arith.mulf %177, %2 : vector<8x128xf32>
    %179 = vector.broadcast %175 : f32 to vector<8x128xf32>
    %180 = arith.addf %179, %178 : vector<8x128xf32>
    %c44 = arith.constant 44 : index
    %181 = memref.load %arg3[%c44] : memref<97xf32, #tpu.memory_space<smem>>
    %cst_19 = arith.constant 0.000000e+00 : f32
    %182 = vector.broadcast %cst_19 : f32 to vector<8x128xf32>
    %183 = arith.maximumf %180, %182 : vector<8x128xf32>
    %184 = vector.broadcast %181 : f32 to vector<8x128xf32>
    %185 = arith.mulf %184, %183 : vector<8x128xf32>
    %186 = arith.addf %174, %185 : vector<8x128xf32>
    %c46 = arith.constant 46 : index
    %187 = memref.load %arg3[%c46] : memref<97xf32, #tpu.memory_space<smem>>
    %c45 = arith.constant 45 : index
    %188 = memref.load %arg3[%c45] : memref<97xf32, #tpu.memory_space<smem>>
    %189 = vector.broadcast %188 : f32 to vector<8x128xf32>
    %190 = arith.mulf %189, %2 : vector<8x128xf32>
    %191 = vector.broadcast %187 : f32 to vector<8x128xf32>
    %192 = arith.addf %191, %190 : vector<8x128xf32>
    %c47 = arith.constant 47 : index
    %193 = memref.load %arg3[%c47] : memref<97xf32, #tpu.memory_space<smem>>
    %cst_20 = arith.constant 0.000000e+00 : f32
    %194 = vector.broadcast %cst_20 : f32 to vector<8x128xf32>
    %195 = arith.maximumf %192, %194 : vector<8x128xf32>
    %196 = vector.broadcast %193 : f32 to vector<8x128xf32>
    %197 = arith.mulf %196, %195 : vector<8x128xf32>
    %198 = arith.addf %186, %197 : vector<8x128xf32>
    %c49 = arith.constant 49 : index
    %199 = memref.load %arg3[%c49] : memref<97xf32, #tpu.memory_space<smem>>
    %c48 = arith.constant 48 : index
    %200 = memref.load %arg3[%c48] : memref<97xf32, #tpu.memory_space<smem>>
    %201 = vector.broadcast %200 : f32 to vector<8x128xf32>
    %202 = arith.mulf %201, %2 : vector<8x128xf32>
    %203 = vector.broadcast %199 : f32 to vector<8x128xf32>
    %204 = arith.addf %203, %202 : vector<8x128xf32>
    %c50 = arith.constant 50 : index
    %205 = memref.load %arg3[%c50] : memref<97xf32, #tpu.memory_space<smem>>
    %cst_21 = arith.constant 0.000000e+00 : f32
    %206 = vector.broadcast %cst_21 : f32 to vector<8x128xf32>
    %207 = arith.maximumf %204, %206 : vector<8x128xf32>
    %208 = vector.broadcast %205 : f32 to vector<8x128xf32>
    %209 = arith.mulf %208, %207 : vector<8x128xf32>
    %210 = arith.addf %198, %209 : vector<8x128xf32>
    %c52 = arith.constant 52 : index
    %211 = memref.load %arg3[%c52] : memref<97xf32, #tpu.memory_space<smem>>
    %c51 = arith.constant 51 : index
    %212 = memref.load %arg3[%c51] : memref<97xf32, #tpu.memory_space<smem>>
    %213 = vector.broadcast %212 : f32 to vector<8x128xf32>
    %214 = arith.mulf %213, %2 : vector<8x128xf32>
    %215 = vector.broadcast %211 : f32 to vector<8x128xf32>
    %216 = arith.addf %215, %214 : vector<8x128xf32>
    %c53 = arith.constant 53 : index
    %217 = memref.load %arg3[%c53] : memref<97xf32, #tpu.memory_space<smem>>
    %cst_22 = arith.constant 0.000000e+00 : f32
    %218 = vector.broadcast %cst_22 : f32 to vector<8x128xf32>
    %219 = arith.maximumf %216, %218 : vector<8x128xf32>
    %220 = vector.broadcast %217 : f32 to vector<8x128xf32>
    %221 = arith.mulf %220, %219 : vector<8x128xf32>
    %222 = arith.addf %210, %221 : vector<8x128xf32>
    %c55 = arith.constant 55 : index
    %223 = memref.load %arg3[%c55] : memref<97xf32, #tpu.memory_space<smem>>
    %c54 = arith.constant 54 : index
    %224 = memref.load %arg3[%c54] : memref<97xf32, #tpu.memory_space<smem>>
    %225 = vector.broadcast %224 : f32 to vector<8x128xf32>
    %226 = arith.mulf %225, %2 : vector<8x128xf32>
    %227 = vector.broadcast %223 : f32 to vector<8x128xf32>
    %228 = arith.addf %227, %226 : vector<8x128xf32>
    %c56 = arith.constant 56 : index
    %229 = memref.load %arg3[%c56] : memref<97xf32, #tpu.memory_space<smem>>
    %cst_23 = arith.constant 0.000000e+00 : f32
    %230 = vector.broadcast %cst_23 : f32 to vector<8x128xf32>
    %231 = arith.maximumf %228, %230 : vector<8x128xf32>
    %232 = vector.broadcast %229 : f32 to vector<8x128xf32>
    %233 = arith.mulf %232, %231 : vector<8x128xf32>
    %234 = arith.addf %222, %233 : vector<8x128xf32>
    %c58 = arith.constant 58 : index
    %235 = memref.load %arg3[%c58] : memref<97xf32, #tpu.memory_space<smem>>
    %c57 = arith.constant 57 : index
    %236 = memref.load %arg3[%c57] : memref<97xf32, #tpu.memory_space<smem>>
    %237 = vector.broadcast %236 : f32 to vector<8x128xf32>
    %238 = arith.mulf %237, %2 : vector<8x128xf32>
    %239 = vector.broadcast %235 : f32 to vector<8x128xf32>
    %240 = arith.addf %239, %238 : vector<8x128xf32>
    %c59 = arith.constant 59 : index
    %241 = memref.load %arg3[%c59] : memref<97xf32, #tpu.memory_space<smem>>
    %cst_24 = arith.constant 0.000000e+00 : f32
    %242 = vector.broadcast %cst_24 : f32 to vector<8x128xf32>
    %243 = arith.maximumf %240, %242 : vector<8x128xf32>
    %244 = vector.broadcast %241 : f32 to vector<8x128xf32>
    %245 = arith.mulf %244, %243 : vector<8x128xf32>
    %246 = arith.addf %234, %245 : vector<8x128xf32>
    %c61 = arith.constant 61 : index
    %247 = memref.load %arg3[%c61] : memref<97xf32, #tpu.memory_space<smem>>
    %c60 = arith.constant 60 : index
    %248 = memref.load %arg3[%c60] : memref<97xf32, #tpu.memory_space<smem>>
    %249 = vector.broadcast %248 : f32 to vector<8x128xf32>
    %250 = arith.mulf %249, %2 : vector<8x128xf32>
    %251 = vector.broadcast %247 : f32 to vector<8x128xf32>
    %252 = arith.addf %251, %250 : vector<8x128xf32>
    %c62 = arith.constant 62 : index
    %253 = memref.load %arg3[%c62] : memref<97xf32, #tpu.memory_space<smem>>
    %cst_25 = arith.constant 0.000000e+00 : f32
    %254 = vector.broadcast %cst_25 : f32 to vector<8x128xf32>
    %255 = arith.maximumf %252, %254 : vector<8x128xf32>
    %256 = vector.broadcast %253 : f32 to vector<8x128xf32>
    %257 = arith.mulf %256, %255 : vector<8x128xf32>
    %258 = arith.addf %246, %257 : vector<8x128xf32>
    %c64 = arith.constant 64 : index
    %259 = memref.load %arg3[%c64] : memref<97xf32, #tpu.memory_space<smem>>
    %c63 = arith.constant 63 : index
    %260 = memref.load %arg3[%c63] : memref<97xf32, #tpu.memory_space<smem>>
    %261 = vector.broadcast %260 : f32 to vector<8x128xf32>
    %262 = arith.mulf %261, %2 : vector<8x128xf32>
    %263 = vector.broadcast %259 : f32 to vector<8x128xf32>
    %264 = arith.addf %263, %262 : vector<8x128xf32>
    %c65 = arith.constant 65 : index
    %265 = memref.load %arg3[%c65] : memref<97xf32, #tpu.memory_space<smem>>
    %cst_26 = arith.constant 0.000000e+00 : f32
    %266 = vector.broadcast %cst_26 : f32 to vector<8x128xf32>
    %267 = arith.maximumf %264, %266 : vector<8x128xf32>
    %268 = vector.broadcast %265 : f32 to vector<8x128xf32>
    %269 = arith.mulf %268, %267 : vector<8x128xf32>
    %270 = arith.addf %258, %269 : vector<8x128xf32>
    %c67 = arith.constant 67 : index
    %271 = memref.load %arg3[%c67] : memref<97xf32, #tpu.memory_space<smem>>
    %c66 = arith.constant 66 : index
    %272 = memref.load %arg3[%c66] : memref<97xf32, #tpu.memory_space<smem>>
    %273 = vector.broadcast %272 : f32 to vector<8x128xf32>
    %274 = arith.mulf %273, %2 : vector<8x128xf32>
    %275 = vector.broadcast %271 : f32 to vector<8x128xf32>
    %276 = arith.addf %275, %274 : vector<8x128xf32>
    %c68 = arith.constant 68 : index
    %277 = memref.load %arg3[%c68] : memref<97xf32, #tpu.memory_space<smem>>
    %cst_27 = arith.constant 0.000000e+00 : f32
    %278 = vector.broadcast %cst_27 : f32 to vector<8x128xf32>
    %279 = arith.maximumf %276, %278 : vector<8x128xf32>
    %280 = vector.broadcast %277 : f32 to vector<8x128xf32>
    %281 = arith.mulf %280, %279 : vector<8x128xf32>
    %282 = arith.addf %270, %281 : vector<8x128xf32>
    %c70 = arith.constant 70 : index
    %283 = memref.load %arg3[%c70] : memref<97xf32, #tpu.memory_space<smem>>
    %c69 = arith.constant 69 : index
    %284 = memref.load %arg3[%c69] : memref<97xf32, #tpu.memory_space<smem>>
    %285 = vector.broadcast %284 : f32 to vector<8x128xf32>
    %286 = arith.mulf %285, %2 : vector<8x128xf32>
    %287 = vector.broadcast %283 : f32 to vector<8x128xf32>
    %288 = arith.addf %287, %286 : vector<8x128xf32>
    %c71 = arith.constant 71 : index
    %289 = memref.load %arg3[%c71] : memref<97xf32, #tpu.memory_space<smem>>
    %cst_28 = arith.constant 0.000000e+00 : f32
    %290 = vector.broadcast %cst_28 : f32 to vector<8x128xf32>
    %291 = arith.maximumf %288, %290 : vector<8x128xf32>
    %292 = vector.broadcast %289 : f32 to vector<8x128xf32>
    %293 = arith.mulf %292, %291 : vector<8x128xf32>
    %294 = arith.addf %282, %293 : vector<8x128xf32>
    %c73 = arith.constant 73 : index
    %295 = memref.load %arg3[%c73] : memref<97xf32, #tpu.memory_space<smem>>
    %c72 = arith.constant 72 : index
    %296 = memref.load %arg3[%c72] : memref<97xf32, #tpu.memory_space<smem>>
    %297 = vector.broadcast %296 : f32 to vector<8x128xf32>
    %298 = arith.mulf %297, %2 : vector<8x128xf32>
    %299 = vector.broadcast %295 : f32 to vector<8x128xf32>
    %300 = arith.addf %299, %298 : vector<8x128xf32>
    %c74 = arith.constant 74 : index
    %301 = memref.load %arg3[%c74] : memref<97xf32, #tpu.memory_space<smem>>
    %cst_29 = arith.constant 0.000000e+00 : f32
    %302 = vector.broadcast %cst_29 : f32 to vector<8x128xf32>
    %303 = arith.maximumf %300, %302 : vector<8x128xf32>
    %304 = vector.broadcast %301 : f32 to vector<8x128xf32>
    %305 = arith.mulf %304, %303 : vector<8x128xf32>
    %306 = arith.addf %294, %305 : vector<8x128xf32>
    %c76 = arith.constant 76 : index
    %307 = memref.load %arg3[%c76] : memref<97xf32, #tpu.memory_space<smem>>
    %c75 = arith.constant 75 : index
    %308 = memref.load %arg3[%c75] : memref<97xf32, #tpu.memory_space<smem>>
    %309 = vector.broadcast %308 : f32 to vector<8x128xf32>
    %310 = arith.mulf %309, %2 : vector<8x128xf32>
    %311 = vector.broadcast %307 : f32 to vector<8x128xf32>
    %312 = arith.addf %311, %310 : vector<8x128xf32>
    %c77 = arith.constant 77 : index
    %313 = memref.load %arg3[%c77] : memref<97xf32, #tpu.memory_space<smem>>
    %cst_30 = arith.constant 0.000000e+00 : f32
    %314 = vector.broadcast %cst_30 : f32 to vector<8x128xf32>
    %315 = arith.maximumf %312, %314 : vector<8x128xf32>
    %316 = vector.broadcast %313 : f32 to vector<8x128xf32>
    %317 = arith.mulf %316, %315 : vector<8x128xf32>
    %318 = arith.addf %306, %317 : vector<8x128xf32>
    %c79 = arith.constant 79 : index
    %319 = memref.load %arg3[%c79] : memref<97xf32, #tpu.memory_space<smem>>
    %c78 = arith.constant 78 : index
    %320 = memref.load %arg3[%c78] : memref<97xf32, #tpu.memory_space<smem>>
    %321 = vector.broadcast %320 : f32 to vector<8x128xf32>
    %322 = arith.mulf %321, %2 : vector<8x128xf32>
    %323 = vector.broadcast %319 : f32 to vector<8x128xf32>
    %324 = arith.addf %323, %322 : vector<8x128xf32>
    %c80 = arith.constant 80 : index
    %325 = memref.load %arg3[%c80] : memref<97xf32, #tpu.memory_space<smem>>
    %cst_31 = arith.constant 0.000000e+00 : f32
    %326 = vector.broadcast %cst_31 : f32 to vector<8x128xf32>
    %327 = arith.maximumf %324, %326 : vector<8x128xf32>
    %328 = vector.broadcast %325 : f32 to vector<8x128xf32>
    %329 = arith.mulf %328, %327 : vector<8x128xf32>
    %330 = arith.addf %318, %329 : vector<8x128xf32>
    %c82 = arith.constant 82 : index
    %331 = memref.load %arg3[%c82] : memref<97xf32, #tpu.memory_space<smem>>
    %c81 = arith.constant 81 : index
    %332 = memref.load %arg3[%c81] : memref<97xf32, #tpu.memory_space<smem>>
    %333 = vector.broadcast %332 : f32 to vector<8x128xf32>
    %334 = arith.mulf %333, %2 : vector<8x128xf32>
    %335 = vector.broadcast %331 : f32 to vector<8x128xf32>
    %336 = arith.addf %335, %334 : vector<8x128xf32>
    %c83 = arith.constant 83 : index
    %337 = memref.load %arg3[%c83] : memref<97xf32, #tpu.memory_space<smem>>
    %cst_32 = arith.constant 0.000000e+00 : f32
    %338 = vector.broadcast %cst_32 : f32 to vector<8x128xf32>
    %339 = arith.maximumf %336, %338 : vector<8x128xf32>
    %340 = vector.broadcast %337 : f32 to vector<8x128xf32>
    %341 = arith.mulf %340, %339 : vector<8x128xf32>
    %342 = arith.addf %330, %341 : vector<8x128xf32>
    %c85 = arith.constant 85 : index
    %343 = memref.load %arg3[%c85] : memref<97xf32, #tpu.memory_space<smem>>
    %c84 = arith.constant 84 : index
    %344 = memref.load %arg3[%c84] : memref<97xf32, #tpu.memory_space<smem>>
    %345 = vector.broadcast %344 : f32 to vector<8x128xf32>
    %346 = arith.mulf %345, %2 : vector<8x128xf32>
    %347 = vector.broadcast %343 : f32 to vector<8x128xf32>
    %348 = arith.addf %347, %346 : vector<8x128xf32>
    %c86 = arith.constant 86 : index
    %349 = memref.load %arg3[%c86] : memref<97xf32, #tpu.memory_space<smem>>
    %cst_33 = arith.constant 0.000000e+00 : f32
    %350 = vector.broadcast %cst_33 : f32 to vector<8x128xf32>
    %351 = arith.maximumf %348, %350 : vector<8x128xf32>
    %352 = vector.broadcast %349 : f32 to vector<8x128xf32>
    %353 = arith.mulf %352, %351 : vector<8x128xf32>
    %354 = arith.addf %342, %353 : vector<8x128xf32>
    %c88 = arith.constant 88 : index
    %355 = memref.load %arg3[%c88] : memref<97xf32, #tpu.memory_space<smem>>
    %c87 = arith.constant 87 : index
    %356 = memref.load %arg3[%c87] : memref<97xf32, #tpu.memory_space<smem>>
    %357 = vector.broadcast %356 : f32 to vector<8x128xf32>
    %358 = arith.mulf %357, %2 : vector<8x128xf32>
    %359 = vector.broadcast %355 : f32 to vector<8x128xf32>
    %360 = arith.addf %359, %358 : vector<8x128xf32>
    %c89 = arith.constant 89 : index
    %361 = memref.load %arg3[%c89] : memref<97xf32, #tpu.memory_space<smem>>
    %cst_34 = arith.constant 0.000000e+00 : f32
    %362 = vector.broadcast %cst_34 : f32 to vector<8x128xf32>
    %363 = arith.maximumf %360, %362 : vector<8x128xf32>
    %364 = vector.broadcast %361 : f32 to vector<8x128xf32>
    %365 = arith.mulf %364, %363 : vector<8x128xf32>
    %366 = arith.addf %354, %365 : vector<8x128xf32>
    %c91 = arith.constant 91 : index
    %367 = memref.load %arg3[%c91] : memref<97xf32, #tpu.memory_space<smem>>
    %c90 = arith.constant 90 : index
    %368 = memref.load %arg3[%c90] : memref<97xf32, #tpu.memory_space<smem>>
    %369 = vector.broadcast %368 : f32 to vector<8x128xf32>
    %370 = arith.mulf %369, %2 : vector<8x128xf32>
    %371 = vector.broadcast %367 : f32 to vector<8x128xf32>
    %372 = arith.addf %371, %370 : vector<8x128xf32>
    %c92 = arith.constant 92 : index
    %373 = memref.load %arg3[%c92] : memref<97xf32, #tpu.memory_space<smem>>
    %cst_35 = arith.constant 0.000000e+00 : f32
    %374 = vector.broadcast %cst_35 : f32 to vector<8x128xf32>
    %375 = arith.maximumf %372, %374 : vector<8x128xf32>
    %376 = vector.broadcast %373 : f32 to vector<8x128xf32>
    %377 = arith.mulf %376, %375 : vector<8x128xf32>
    %378 = arith.addf %366, %377 : vector<8x128xf32>
    %c94 = arith.constant 94 : index
    %379 = memref.load %arg3[%c94] : memref<97xf32, #tpu.memory_space<smem>>
    %c93 = arith.constant 93 : index
    %380 = memref.load %arg3[%c93] : memref<97xf32, #tpu.memory_space<smem>>
    %381 = vector.broadcast %380 : f32 to vector<8x128xf32>
    %382 = arith.mulf %381, %2 : vector<8x128xf32>
    %383 = vector.broadcast %379 : f32 to vector<8x128xf32>
    %384 = arith.addf %383, %382 : vector<8x128xf32>
    %c95 = arith.constant 95 : index
    %385 = memref.load %arg3[%c95] : memref<97xf32, #tpu.memory_space<smem>>
    %cst_36 = arith.constant 0.000000e+00 : f32
    %386 = vector.broadcast %cst_36 : f32 to vector<8x128xf32>
    %387 = arith.maximumf %384, %386 : vector<8x128xf32>
    %388 = vector.broadcast %385 : f32 to vector<8x128xf32>
    %389 = arith.mulf %388, %387 : vector<8x128xf32>
    %390 = arith.addf %378, %389 : vector<8x128xf32>
    %cst_37 = arith.constant 0.000000e+00 : f32
    %391 = vector.broadcast %cst_37 : f32 to vector<8x128xf32>
    %c20_38 = arith.constant 20 : index
    %392 = memref.load %arg4[%c20_38] : memref<21xf32, #tpu.memory_space<smem>>
    %393 = vector.broadcast %392 : f32 to vector<8x128xf32>
    %394 = arith.addf %391, %393 : vector<8x128xf32>
    %cst_39 = arith.constant 0.000000e+00 : f32
    %395 = vector.broadcast %cst_39 : f32 to vector<8x128xf32>
    %c0_40 = arith.constant 0 : index
    %396 = memref.load %arg4[%c0_40] : memref<21xf32, #tpu.memory_space<smem>>
    %c1_41 = arith.constant 1 : index
    %397 = memref.load %arg4[%c1_41] : memref<21xf32, #tpu.memory_space<smem>>
    %c2_42 = arith.constant 2 : index
    %398 = memref.load %arg4[%c2_42] : memref<21xf32, #tpu.memory_space<smem>>
    %c3_43 = arith.constant 3 : index
    %399 = memref.load %arg4[%c3_43] : memref<21xf32, #tpu.memory_space<smem>>
    %c4_44 = arith.constant 4 : index
    %400 = memref.load %arg4[%c4_44] : memref<21xf32, #tpu.memory_space<smem>>
    %401 = vector.broadcast %396 : f32 to vector<8x128xf32>
    %402 = arith.subf %0, %401 : vector<8x128xf32>
    %403 = vector.broadcast %397 : f32 to vector<8x128xf32>
    %404 = arith.mulf %402, %403 : vector<8x128xf32>
    %cst_45 = arith.constant 0.707106769 : f32
    %405 = vector.broadcast %cst_45 : f32 to vector<8x128xf32>
    %406 = arith.mulf %404, %405 : vector<8x128xf32>
    %407 = math.erf %406 : vector<8x128xf32>
    %408 = vector.broadcast %398 : f32 to vector<8x128xf32>
    %409 = arith.mulf %408, %407 : vector<8x128xf32>
    %410 = arith.addf %394, %409 : vector<8x128xf32>
    %411 = arith.mulf %404, %404 : vector<8x128xf32>
    %cst_46 = arith.constant 5.000000e-01 : f32
    %412 = vector.broadcast %cst_46 : f32 to vector<8x128xf32>
    %413 = arith.mulf %412, %411 : vector<8x128xf32>
    %414 = vector.broadcast %400 : f32 to vector<8x128xf32>
    %415 = arith.subf %414, %413 : vector<8x128xf32>
    %cst_47 = arith.constant -1.200000e+01 : f32
    %cst_48 = arith.constant 1.200000e+01 : f32
    %416 = vector.broadcast %cst_47 : f32 to vector<8x128xf32>
    %417 = arith.maximumf %416, %415 : vector<8x128xf32>
    %418 = vector.broadcast %cst_48 : f32 to vector<8x128xf32>
    %419 = arith.minimumf %418, %417 : vector<8x128xf32>
    %420 = math.exp %419 : vector<8x128xf32>
    %421 = vector.broadcast %399 : f32 to vector<8x128xf32>
    %422 = arith.mulf %421, %420 : vector<8x128xf32>
    %423 = arith.addf %395, %422 : vector<8x128xf32>
    %c5_49 = arith.constant 5 : index
    %424 = memref.load %arg4[%c5_49] : memref<21xf32, #tpu.memory_space<smem>>
    %c6_50 = arith.constant 6 : index
    %425 = memref.load %arg4[%c6_50] : memref<21xf32, #tpu.memory_space<smem>>
    %c7_51 = arith.constant 7 : index
    %426 = memref.load %arg4[%c7_51] : memref<21xf32, #tpu.memory_space<smem>>
    %c8_52 = arith.constant 8 : index
    %427 = memref.load %arg4[%c8_52] : memref<21xf32, #tpu.memory_space<smem>>
    %c9_53 = arith.constant 9 : index
    %428 = memref.load %arg4[%c9_53] : memref<21xf32, #tpu.memory_space<smem>>
    %429 = vector.broadcast %424 : f32 to vector<8x128xf32>
    %430 = arith.subf %0, %429 : vector<8x128xf32>
    %431 = vector.broadcast %425 : f32 to vector<8x128xf32>
    %432 = arith.mulf %430, %431 : vector<8x128xf32>
    %cst_54 = arith.constant 0.707106769 : f32
    %433 = vector.broadcast %cst_54 : f32 to vector<8x128xf32>
    %434 = arith.mulf %432, %433 : vector<8x128xf32>
    %435 = math.erf %434 : vector<8x128xf32>
    %436 = vector.broadcast %426 : f32 to vector<8x128xf32>
    %437 = arith.mulf %436, %435 : vector<8x128xf32>
    %438 = arith.addf %410, %437 : vector<8x128xf32>
    %439 = arith.mulf %432, %432 : vector<8x128xf32>
    %cst_55 = arith.constant 5.000000e-01 : f32
    %440 = vector.broadcast %cst_55 : f32 to vector<8x128xf32>
    %441 = arith.mulf %440, %439 : vector<8x128xf32>
    %442 = vector.broadcast %428 : f32 to vector<8x128xf32>
    %443 = arith.subf %442, %441 : vector<8x128xf32>
    %cst_56 = arith.constant -1.200000e+01 : f32
    %cst_57 = arith.constant 1.200000e+01 : f32
    %444 = vector.broadcast %cst_56 : f32 to vector<8x128xf32>
    %445 = arith.maximumf %444, %443 : vector<8x128xf32>
    %446 = vector.broadcast %cst_57 : f32 to vector<8x128xf32>
    %447 = arith.minimumf %446, %445 : vector<8x128xf32>
    %448 = math.exp %447 : vector<8x128xf32>
    %449 = vector.broadcast %427 : f32 to vector<8x128xf32>
    %450 = arith.mulf %449, %448 : vector<8x128xf32>
    %451 = arith.addf %423, %450 : vector<8x128xf32>
    %c10_58 = arith.constant 10 : index
    %452 = memref.load %arg4[%c10_58] : memref<21xf32, #tpu.memory_space<smem>>
    %c11_59 = arith.constant 11 : index
    %453 = memref.load %arg4[%c11_59] : memref<21xf32, #tpu.memory_space<smem>>
    %c12_60 = arith.constant 12 : index
    %454 = memref.load %arg4[%c12_60] : memref<21xf32, #tpu.memory_space<smem>>
    %c13_61 = arith.constant 13 : index
    %455 = memref.load %arg4[%c13_61] : memref<21xf32, #tpu.memory_space<smem>>
    %c14_62 = arith.constant 14 : index
    %456 = memref.load %arg4[%c14_62] : memref<21xf32, #tpu.memory_space<smem>>
    %457 = vector.broadcast %452 : f32 to vector<8x128xf32>
    %458 = arith.subf %0, %457 : vector<8x128xf32>
    %459 = vector.broadcast %453 : f32 to vector<8x128xf32>
    %460 = arith.mulf %458, %459 : vector<8x128xf32>
    %cst_63 = arith.constant 0.707106769 : f32
    %461 = vector.broadcast %cst_63 : f32 to vector<8x128xf32>
    %462 = arith.mulf %460, %461 : vector<8x128xf32>
    %463 = math.erf %462 : vector<8x128xf32>
    %464 = vector.broadcast %454 : f32 to vector<8x128xf32>
    %465 = arith.mulf %464, %463 : vector<8x128xf32>
    %466 = arith.addf %438, %465 : vector<8x128xf32>
    %467 = arith.mulf %460, %460 : vector<8x128xf32>
    %cst_64 = arith.constant 5.000000e-01 : f32
    %468 = vector.broadcast %cst_64 : f32 to vector<8x128xf32>
    %469 = arith.mulf %468, %467 : vector<8x128xf32>
    %470 = vector.broadcast %456 : f32 to vector<8x128xf32>
    %471 = arith.subf %470, %469 : vector<8x128xf32>
    %cst_65 = arith.constant -1.200000e+01 : f32
    %cst_66 = arith.constant 1.200000e+01 : f32
    %472 = vector.broadcast %cst_65 : f32 to vector<8x128xf32>
    %473 = arith.maximumf %472, %471 : vector<8x128xf32>
    %474 = vector.broadcast %cst_66 : f32 to vector<8x128xf32>
    %475 = arith.minimumf %474, %473 : vector<8x128xf32>
    %476 = math.exp %475 : vector<8x128xf32>
    %477 = vector.broadcast %455 : f32 to vector<8x128xf32>
    %478 = arith.mulf %477, %476 : vector<8x128xf32>
    %479 = arith.addf %451, %478 : vector<8x128xf32>
    %c15_67 = arith.constant 15 : index
    %480 = memref.load %arg4[%c15_67] : memref<21xf32, #tpu.memory_space<smem>>
    %c16_68 = arith.constant 16 : index
    %481 = memref.load %arg4[%c16_68] : memref<21xf32, #tpu.memory_space<smem>>
    %c17_69 = arith.constant 17 : index
    %482 = memref.load %arg4[%c17_69] : memref<21xf32, #tpu.memory_space<smem>>
    %c18_70 = arith.constant 18 : index
    %483 = memref.load %arg4[%c18_70] : memref<21xf32, #tpu.memory_space<smem>>
    %c19_71 = arith.constant 19 : index
    %484 = memref.load %arg4[%c19_71] : memref<21xf32, #tpu.memory_space<smem>>
    %485 = vector.broadcast %480 : f32 to vector<8x128xf32>
    %486 = arith.subf %0, %485 : vector<8x128xf32>
    %487 = vector.broadcast %481 : f32 to vector<8x128xf32>
    %488 = arith.mulf %486, %487 : vector<8x128xf32>
    %cst_72 = arith.constant 0.707106769 : f32
    %489 = vector.broadcast %cst_72 : f32 to vector<8x128xf32>
    %490 = arith.mulf %488, %489 : vector<8x128xf32>
    %491 = math.erf %490 : vector<8x128xf32>
    %492 = vector.broadcast %482 : f32 to vector<8x128xf32>
    %493 = arith.mulf %492, %491 : vector<8x128xf32>
    %494 = arith.addf %466, %493 : vector<8x128xf32>
    %495 = arith.mulf %488, %488 : vector<8x128xf32>
    %cst_73 = arith.constant 5.000000e-01 : f32
    %496 = vector.broadcast %cst_73 : f32 to vector<8x128xf32>
    %497 = arith.mulf %496, %495 : vector<8x128xf32>
    %498 = vector.broadcast %484 : f32 to vector<8x128xf32>
    %499 = arith.subf %498, %497 : vector<8x128xf32>
    %cst_74 = arith.constant -1.200000e+01 : f32
    %cst_75 = arith.constant 1.200000e+01 : f32
    %500 = vector.broadcast %cst_74 : f32 to vector<8x128xf32>
    %501 = arith.maximumf %500, %499 : vector<8x128xf32>
    %502 = vector.broadcast %cst_75 : f32 to vector<8x128xf32>
    %503 = arith.minimumf %502, %501 : vector<8x128xf32>
    %504 = math.exp %503 : vector<8x128xf32>
    %505 = vector.broadcast %483 : f32 to vector<8x128xf32>
    %506 = arith.mulf %505, %504 : vector<8x128xf32>
    %507 = arith.addf %479, %506 : vector<8x128xf32>
    %cst_76 = arith.constant 9.99999997E-7 : f32
    %cst_77 = arith.constant 0.999998986 : f32
    %508 = vector.broadcast %cst_76 : f32 to vector<8x128xf32>
    %509 = arith.maximumf %508, %494 : vector<8x128xf32>
    %510 = vector.broadcast %cst_77 : f32 to vector<8x128xf32>
    %511 = arith.minimumf %510, %509 : vector<8x128xf32>
    %512 = math.log %511 : vector<8x128xf32>
    %cst_78 = arith.constant 1.000000e+00 : f32
    %513 = vector.broadcast %cst_78 : f32 to vector<8x128xf32>
    %514 = arith.subf %513, %511 : vector<8x128xf32>
    %515 = math.log %514 : vector<8x128xf32>
    %516 = arith.subf %512, %515 : vector<8x128xf32>
    %517 = arith.subf %516, %390 : vector<8x128xf32>
    %518 = arith.mulf %517, %517 : vector<8x128xf32>
    %cst_79 = arith.constant -5.000000e-01 : f32
    %519 = vector.broadcast %cst_79 : f32 to vector<8x128xf32>
    %520 = arith.mulf %519, %518 : vector<8x128xf32>
    %cst_80 = arith.constant 0.918938517 : f32
    %521 = vector.broadcast %cst_80 : f32 to vector<8x128xf32>
    %522 = arith.subf %520, %521 : vector<8x128xf32>
    %523 = math.log %507 : vector<8x128xf32>
    %524 = arith.addf %512, %515 : vector<8x128xf32>
    %525 = arith.subf %523, %524 : vector<8x128xf32>
    %526 = arith.addf %522, %525 : vector<8x128xf32>
    %c0_81 = arith.constant 0 : index
    %c0_82 = arith.constant 0 : index
    %c0_83 = arith.constant 0 : index
    %527 = vector.load %arg5[%c0_81, %c0_82, %c0_83] : memref<4x8x128xf32, #tpu.memory_space<vmem>>, vector<1x8x128xf32>
    %528 = vector.shape_cast %527 : vector<1x8x128xf32> to vector<8x128xf32>
    %529 = vector.shape_cast %526 : vector<8x128xf32> to vector<1x8x128xf32>
    tpu.vector_store %arg5[%c0_81, %c0_82, %c0_83], %529 {strides = array<i32>} : memref<4x8x128xf32, #tpu.memory_space<vmem>>, vector<1x8x128xf32>,
    %c1_84 = arith.constant 1 : index
    %c0_85 = arith.constant 0 : index
    %c0_86 = arith.constant 0 : index
    %530 = vector.load %arg5[%c1_84, %c0_85, %c0_86] : memref<4x8x128xf32, #tpu.memory_space<vmem>>, vector<1x8x128xf32>
    %531 = vector.shape_cast %530 : vector<1x8x128xf32> to vector<8x128xf32>
    %532 = vector.shape_cast %517 : vector<8x128xf32> to vector<1x8x128xf32>
    tpu.vector_store %arg5[%c1_84, %c0_85, %c0_86], %532 {strides = array<i32>} : memref<4x8x128xf32, #tpu.memory_space<vmem>>, vector<1x8x128xf32>,
    %c2_87 = arith.constant 2 : index
    %c0_88 = arith.constant 0 : index
    %c0_89 = arith.constant 0 : index
    %533 = vector.load %arg5[%c2_87, %c0_88, %c0_89] : memref<4x8x128xf32, #tpu.memory_space<vmem>>, vector<1x8x128xf32>
    %534 = vector.shape_cast %533 : vector<1x8x128xf32> to vector<8x128xf32>
    %535 = vector.shape_cast %522 : vector<8x128xf32> to vector<1x8x128xf32>
    tpu.vector_store %arg5[%c2_87, %c0_88, %c0_89], %535 {strides = array<i32>} : memref<4x8x128xf32, #tpu.memory_space<vmem>>, vector<1x8x128xf32>,
    %c3_90 = arith.constant 3 : index
    %c0_91 = arith.constant 0 : index
    %c0_92 = arith.constant 0 : index
    %536 = vector.load %arg5[%c3_90, %c0_91, %c0_92] : memref<4x8x128xf32, #tpu.memory_space<vmem>>, vector<1x8x128xf32>
    %537 = vector.shape_cast %536 : vector<1x8x128xf32> to vector<8x128xf32>
    %538 = vector.shape_cast %525 : vector<8x128xf32> to vector<1x8x128xf32>
    tpu.vector_store %arg5[%c3_90, %c0_91, %c0_92], %538 {strides = array<i32>} : memref<4x8x128xf32, #tpu.memory_space<vmem>>, vector<1x8x128xf32>,
    return
  }
  func.func @transform_0(%arg0: i32) -> (i32, i32, i32) {
    %c0_i32 = arith.constant 0 : i32
    %c0_i32_0 = arith.constant 0 : i32
    %c0_i32_1 = arith.constant 0 : i32
    return %c0_i32, %c0_i32_0, %arg0 : i32, i32, i32
  }
  func.func @transform_1(%arg0: i32) -> (i32, i32) {
    %c0_i32 = arith.constant 0 : i32
    %c0_i32_0 = arith.constant 0 : i32
    return %c0_i32, %arg0 : i32, i32
  }
  func.func @transform_2(%arg0: i32) -> i32 {
    %c0_i32 = arith.constant 0 : i32
    %c0_i32_0 = arith.constant 0 : i32
    return %c0_i32 : i32
  }
  func.func @transform_3(%arg0: i32) -> i32 {
    %c0_i32 = arith.constant 0 : i32
    %c0_i32_0 = arith.constant 0 : i32
    return %c0_i32 : i32
  }
  func.func @transform_4(%arg0: i32) -> (i32, i32, i32) {
    %c0_i32 = arith.constant 0 : i32
    %c0_i32_0 = arith.constant 0 : i32
    %c0_i32_1 = arith.constant 0 : i32
    return %c0_i32, %c0_i32_0, %arg0 : i32, i32, i32
  }
}

</mosaic_0001>

<llo_original>
// kernel: cdf_flow_forward.1
$region0: #{cdf_flow_forward.1}
  #allocation0 [shape = 'u32[]', space=smem, size = 0x4, offset = 0x4, fixed_abs, tag = 'smem constant byte address 0x4 - core index']
  #allocation1 [shape = 'u32[72,128]{1,0:T(1,128)}', space=vmem, size = 0x9000, scoped, tag = 'internal scratch']
  %s0 = inlined_call_operand.vmem [shape: f32[1,8,128], index: 0, kind: input, shape index: {}]
  %s1 = inlined_call_operand.vmem [shape: f32[8,128], index: 1, kind: input, shape index: {}]
  %s2 = inlined_call_operand.vmem [shape: f32[97], index: 2, kind: input, shape index: {}]
  %s3 = inlined_call_operand.vmem [shape: f32[21], index: 3, kind: input, shape index: {}]
  %s4 = inlined_call_operand.vmem [shape: f32[4,8,128], index: 4, kind: output, shape index: {}]
  %s5 = sld [smem:[#allocation0]]
  $region34: #{cdf_flow_forward.1} parent=0
    _
  %s7 = ssub.s32 1, %s5
  %s8 = scalar_select 0, %s7, %s5
  $region1: #{cdf_flow_forward.1} parent=0
    #allocation2 [shape = 'u8[512]{0}', space=smem, size = 0x200, scoped, tag = 'input window, operand 2, single buffered']
    #allocation3 [shape = 's32[1]{0}', space=sflag, size = 0x4, scoped, tag = 'scoped memory for cdf_flow_forward.1']
    #allocation4 [shape = 'u8[512]{0}', space=smem, size = 0x200, scoped, tag = 'input window, operand 3, single buffered']
    #allocation5 [shape = 's32[1]{0}', space=sflag, size = 0x4, scoped, tag = 'scoped memory for cdf_flow_forward.1']
    %9 = vsyncpa [#allocation3], 0
    %10 = vsyncpa [#allocation5], 0
    // Predicated region
    $region2: #{cdf_flow_forward.1} parent=1 // pred_check
      _
    $region3: #{cdf_flow_forward.1} parent=1 // pred_check_branch
      %12 = sbr.rel (0) target = $region5
    $region4: #{cdf_flow_forward.1} parent=1 // pred_region
      _
    $region5: #{cdf_flow_forward.1} parent=1 // pred_fallthru
      _
    // Predicated region
    $region6: #{cdf_flow_forward.1} parent=1 // pred_check
      _
    $region7: #{cdf_flow_forward.1} parent=1 // pred_check_branch
      %14 = sbr.rel (0) target = $region9
    $region8: #{cdf_flow_forward.1} parent=1 // pred_region
      _
    $region9: #{cdf_flow_forward.1} parent=1 // pred_fallthru
      _
    // Predicated region
    $region10: #{cdf_flow_forward.1} parent=1 // pred_check
      _
    $region11: #{cdf_flow_forward.1} parent=1 // pred_check_branch
      %16 = sbr.rel (0) target = $region13
    $region12: #{cdf_flow_forward.1} parent=1 // pred_region
      %18 = vsyncadd [#allocation3], 0
      %s20 = sshll.u32 %s2, 4
      %s21 = int_to_ptr.vmem [resolvable:$true] %s20
      %23 = dma.vmem_to_smem %s21, 16, [#allocation2], [#allocation3]
    $region13: #{cdf_flow_forward.1} parent=1 // pred_fallthru
      _
    // Predicated region
    $region14: #{cdf_flow_forward.1} parent=1 // pred_check
      _
    $region15: #{cdf_flow_forward.1} parent=1 // pred_check_branch
      %25 = sbr.rel (0) target = $region17
    $region16: #{cdf_flow_forward.1} parent=1 // pred_region
      %27 = vsyncadd [#allocation5], 0
      %s29 = sshll.u32 %s3, 4
      %s30 = int_to_ptr.vmem [resolvable:$true] %s29
      %32 = dma.vmem_to_smem %s30, 16, [#allocation4], [#allocation5]
    $region17: #{cdf_flow_forward.1} parent=1 // pred_fallthru
      _
    // Predicated region
    $region18: #{cdf_flow_forward.1} parent=1 // pred_check
      _
    $region19: #{cdf_flow_forward.1} parent=1 // pred_check_branch
      %34 = sbr.rel (0) target = $region21
    $region20: #{cdf_flow_forward.1} parent=1 // pred_region
      %36 = dma.done [#allocation3], 16
    $region21: #{cdf_flow_forward.1} parent=1 // pred_fallthru
      _
    // Predicated region
    $region22: #{cdf_flow_forward.1} parent=1 // pred_check
      _
    $region23: #{cdf_flow_forward.1} parent=1 // pred_check_branch
      %38 = sbr.rel (0) target = $region25
    $region24: #{cdf_flow_forward.1} parent=1 // pred_region
      %40 = dma.done [#allocation5], 16
    $region25: #{cdf_flow_forward.1} parent=1 // pred_fallthru
      _
    %41 = sfence
    %v42 = vld [vmem:[%s1] sm:$0xff]
    %v43 = vld [vmem:[%s0] sm:$0xff]
    %s44 = sld [smem:[#allocation2 + $0x60]]
    %v45 = vstv %s44
    %v46 = vadd.f32 %v45, 0.0
    %s47 = sld [smem:[#allocation2 + $0x1]]
    %s48 = sld [smem:[#allocation2]]
    %v49 = vstv %s48
    %v50 = vmul.f32 %v49, %v43
    %v51 = vstv %s47
    %v52 = vadd.f32 %v51, %v50
    %s53 = sld [smem:[#allocation2 + $0x2]]
    %v54 = vmax.f32 %v52, 0.0
    %v55 = vstv %s53
    %v56 = vmul.f32 %v55, %v54
    %v57 = vadd.f32 %v46, %v56
    %s58 = sld [smem:[#allocation2 + $0x4]]
    %s59 = sld [smem:[#allocation2 + $0x3]]
    %v60 = vstv %s59
    %v61 = vmul.f32 %v60, %v43
    %v62 = vstv %s58
    %v63 = vadd.f32 %v62, %v61
    %s64 = sld [smem:[#allocation2 + $0x5]]
    %v65 = vmax.f32 %v63, 0.0
    %v66 = vstv %s64
    %v67 = vmul.f32 %v66, %v65
    %v68 = vadd.f32 %v57, %v67
    %s69 = sld [smem:[#allocation2 + $0x7]]
    %s70 = sld [smem:[#allocation2 + $0x6]]
    %v71 = vstv %s70
    %v72 = vmul.f32 %v71, %v43
    %v73 = vstv %s69
    %v74 = vadd.f32 %v73, %v72
    %s75 = sld [smem:[#allocation2 + $0x8]]
    %v76 = vmax.f32 %v74, 0.0
    %v77 = vstv %s75
    %v78 = vmul.f32 %v77, %v76
    %v79 = vadd.f32 %v68, %v78
    %s80 = sld [smem:[#allocation2 + $0xa]]
    %s81 = sld [smem:[#allocation2 + $0x9]]
    %v82 = vstv %s81
    %v83 = vmul.f32 %v82, %v43
    %v84 = vstv %s80
    %v85 = vadd.f32 %v84, %v83
    %s86 = sld [smem:[#allocation2 + $0xb]]
    %v87 = vmax.f32 %v85, 0.0
    %v88 = vstv %s86
    %v89 = vmul.f32 %v88, %v87
    %v90 = vadd.f32 %v79, %v89
    %s91 = sld [smem:[#allocation2 + $0xd]]
    %s92 = sld [smem:[#allocation2 + $0xc]]
    %v93 = vstv %s92
    %v94 = vmul.f32 %v93, %v43
    %v95 = vstv %s91
    %v96 = vadd.f32 %v95, %v94
    %s97 = sld [smem:[#allocation2 + $0xe]]
    %v98 = vmax.f32 %v96, 0.0
    %v99 = vstv %s97
    %v100 = vmul.f32 %v99, %v98
    %v101 = vadd.f32 %v90, %v100
    %s102 = sld [smem:[#allocation2 + $0x10]]
    %s103 = sld [smem:[#allocation2 + $0xf]]
    %v104 = vstv %s103
    %v105 = vmul.f32 %v104, %v43
    %v106 = vstv %s102
    %v107 = vadd.f32 %v106, %v105
    %s108 = sld [smem:[#allocation2 + $0x11]]
    %v109 = vmax.f32 %v107, 0.0
    %v110 = vstv %s108
    %v111 = vmul.f32 %v110, %v109
    %v112 = vadd.f32 %v101, %v111
    %s113 = sld [smem:[#allocation2 + $0x13]]
    %s114 = sld [smem:[#allocation2 + $0x12]]
    %v115 = vstv %s114
    %v116 = vmul.f32 %v115, %v43
    %v117 = vstv %s113
    %v118 = vadd.f32 %v117, %v116
    %s119 = sld [smem:[#allocation2 + $0x14]]
    %v120 = vmax.f32 %v118, 0.0
    %v121 = vstv %s119
    %v122 = vmul.f32 %v121, %v120
    %v123 = vadd.f32 %v112, %v122
    %s124 = sld [smem:[#allocation2 + $0x16]]
    %s125 = sld [smem:[#allocation2 + $0x15]]
    %v126 = vstv %s125
    %v127 = vmul.f32 %v126, %v43
    %v128 = vstv %s124
    %v129 = vadd.f32 %v128, %v127
    %s130 = sld [smem:[#allocation2 + $0x17]]
    %v131 = vmax.f32 %v129, 0.0
    %v132 = vstv %s130
    %v133 = vmul.f32 %v132, %v131
    %v134 = vadd.f32 %v123, %v133
    %s135 = sld [smem:[#allocation2 + $0x19]]
    %s136 = sld [smem:[#allocation2 + $0x18]]
    %v137 = vstv %s136
    %v138 = vmul.f32 %v137, %v43
    %v139 = vstv %s135
    %v140 = vadd.f32 %v139, %v138
    %s141 = sld [smem:[#allocation2 + $0x1a]]
    %v142 = vmax.f32 %v140, 0.0
    %v143 = vstv %s141
    %v144 = vmul.f32 %v143, %v142
    %v145 = vadd.f32 %v134, %v144
    %s146 = sld [smem:[#allocation2 + $0x1c]]
    %s147 = sld [smem:[#allocation2 + $0x1b]]
    %v148 = vstv %s147
    %v149 = vmul.f32 %v148, %v43
    %v150 = vstv %s146
    %v151 = vadd.f32 %v150, %v149
    %s152 = sld [smem:[#allocation2 + $0x1d]]
    %v153 = vmax.f32 %v151, 0.0
    %v154 = vstv %s152
    %v155 = vmul.f32 %v154, %v153
    %v156 = vadd.f32 %v145, %v155
    %s157 = sld [smem:[#allocation2 + $0x1f]]
    %s158 = sld [smem:[#allocation2 + $0x1e]]
    %v159 = vstv %s158
    %v160 = vmul.f32 %v159, %v43
    %v161 = vstv %s157
    %v162 = vadd.f32 %v161, %v160
    %s163 = sld [smem:[#allocation2 + $0x20]]
    %v164 = vmax.f32 %v162, 0.0
    %v165 = vstv %s163
    %v166 = vmul.f32 %v165, %v164
    %v167 = vadd.f32 %v156, %v166
    %s168 = sld [smem:[#allocation2 + $0x22]]
    %s169 = sld [smem:[#allocation2 + $0x21]]
    %v170 = vstv %s169
    %v171 = vmul.f32 %v170, %v43
    %v172 = vstv %s168
    %v173 = vadd.f32 %v172, %v171
    %s174 = sld [smem:[#allocation2 + $0x23]]
    %v175 = vmax.f32 %v173, 0.0
    %v176 = vstv %s174
    %v177 = vmul.f32 %v176, %v175
    %v178 = vadd.f32 %v167, %v177
    %s179 = sld [smem:[#allocation2 + $0x25]]
    %s180 = sld [smem:[#allocation2 + $0x24]]
    %v181 = vstv %s180
    %v182 = vmul.f32 %v181, %v43
    %v183 = vstv %s179
    %v184 = vadd.f32 %v183, %v182
    %s185 = sld [smem:[#allocation2 + $0x26]]
    %v186 = vmax.f32 %v184, 0.0
    %v187 = vstv %s185
    %v188 = vmul.f32 %v187, %v186
    %v189 = vadd.f32 %v178, %v188
    %s190 = sld [smem:[#allocation2 + $0x28]]
    %s191 = sld [smem:[#allocation2 + $0x27]]
    %v192 = vstv %s191
    %v193 = vmul.f32 %v192, %v43
    %v194 = vstv %s190
    %v195 = vadd.f32 %v194, %v193
    %s196 = sld [smem:[#allocation2 + $0x29]]
    %v197 = vmax.f32 %v195, 0.0
    %v198 = vstv %s196
    %v199 = vmul.f32 %v198, %v197
    %v200 = vadd.f32 %v189, %v199
    %s201 = sld [smem:[#allocation2 + $0x2b]]
    %s202 = sld [smem:[#allocation2 + $0x2a]]
    %v203 = vstv %s202
    %v204 = vmul.f32 %v203, %v43
    %v205 = vstv %s201
    %v206 = vadd.f32 %v205, %v204
    %s207 = sld [smem:[#allocation2 + $0x2c]]
    %v208 = vmax.f32 %v206, 0.0
    %v209 = vstv %s207
    %v210 = vmul.f32 %v209, %v208
    %v211 = vadd.f32 %v200, %v210
    %s212 = sld [smem:[#allocation2 + $0x2e]]
    %s213 = sld [smem:[#allocation2 + $0x2d]]
    %v214 = vstv %s213
    %v215 = vmul.f32 %v214, %v43
    %v216 = vstv %s212
    %v217 = vadd.f32 %v216, %v215
    %s218 = sld [smem:[#allocation2 + $0x2f]]
    %v219 = vmax.f32 %v217, 0.0
    %v220 = vstv %s218
    %v221 = vmul.f32 %v220, %v219
    %v222 = vadd.f32 %v211, %v221
    %s223 = sld [smem:[#allocation2 + $0x31]]
    %s224 = sld [smem:[#allocation2 + $0x30]]
    %v225 = vstv %s224
    %v226 = vmul.f32 %v225, %v43
    %v227 = vstv %s223
    %v228 = vadd.f32 %v227, %v226
    %s229 = sld [smem:[#allocation2 + $0x32]]
    %v230 = vmax.f32 %v228, 0.0
    %v231 = vstv %s229
    %v232 = vmul.f32 %v231, %v230
    %v233 = vadd.f32 %v222, %v232
    %s234 = sld [smem:[#allocation2 + $0x34]]
    %s235 = sld [smem:[#allocation2 + $0x33]]
    %v236 = vstv %s235
    %v237 = vmul.f32 %v236, %v43
    %v238 = vstv %s234
    %v239 = vadd.f32 %v238, %v237
    %s240 = sld [smem:[#allocation2 + $0x35]]
    %v241 = vmax.f32 %v239, 0.0
    %v242 = vstv %s240
    %v243 = vmul.f32 %v242, %v241
    %v244 = vadd.f32 %v233, %v243
    %s245 = sld [smem:[#allocation2 + $0x37]]
    %s246 = sld [smem:[#allocation2 + $0x36]]
    %v247 = vstv %s246
    %v248 = vmul.f32 %v247, %v43
    %v249 = vstv %s245
    %v250 = vadd.f32 %v249, %v248
    %s251 = sld [smem:[#allocation2 + $0x38]]
    %v252 = vmax.f32 %v250, 0.0
    %v253 = vstv %s251
    %v254 = vmul.f32 %v253, %v252
    %v255 = vadd.f32 %v244, %v254
    %s256 = sld [smem:[#allocation2 + $0x3a]]
    %s257 = sld [smem:[#allocation2 + $0x39]]
    %v258 = vstv %s257
    %v259 = vmul.f32 %v258, %v43
    %v260 = vstv %s256
    %v261 = vadd.f32 %v260, %v259
    %s262 = sld [smem:[#allocation2 + $0x3b]]
    %v263 = vmax.f32 %v261, 0.0
    %v264 = vstv %s262
    %v265 = vmul.f32 %v264, %v263
    %v266 = vadd.f32 %v255, %v265
    %s267 = sld [smem:[#allocation2 + $0x3d]]
    %s268 = sld [smem:[#allocation2 + $0x3c]]
    %v269 = vstv %s268
    %v270 = vmul.f32 %v269, %v43
    %v271 = vstv %s267
    %v272 = vadd.f32 %v271, %v270
    %s273 = sld [smem:[#allocation2 + $0x3e]]
    %v274 = vmax.f32 %v272, 0.0
    %v275 = vstv %s273
    %v276 = vmul.f32 %v275, %v274
    %v277 = vadd.f32 %v266, %v276
    %s278 = sld [smem:[#allocation2 + $0x40]]
    %s279 = sld [smem:[#allocation2 + $0x3f]]
    %v280 = vstv %s279
    %v281 = vmul.f32 %v280, %v43
    %v282 = vstv %s278
    %v283 = vadd.f32 %v282, %v281
    %s284 = sld [smem:[#allocation2 + $0x41]]
    %v285 = vmax.f32 %v283, 0.0
    %v286 = vstv %s284
    %v287 = vmul.f32 %v286, %v285
    %v288 = vadd.f32 %v277, %v287
    %s289 = sld [smem:[#allocation2 + $0x43]]
    %s290 = sld [smem:[#allocation2 + $0x42]]
    %v291 = vstv %s290
    %v292 = vmul.f32 %v291, %v43
    %v293 = vstv %s289
    %v294 = vadd.f32 %v293, %v292
    %s295 = sld [smem:[#allocation2 + $0x44]]
    %v296 = vmax.f32 %v294, 0.0
    %v297 = vstv %s295
    %v298 = vmul.f32 %v297, %v296
    %v299 = vadd.f32 %v288, %v298
    %s300 = sld [smem:[#allocation2 + $0x46]]
    %s301 = sld [smem:[#allocation2 + $0x45]]
    %v302 = vstv %s301
    %v303 = vmul.f32 %v302, %v43
    %v304 = vstv %s300
    %v305 = vadd.f32 %v304, %v303
    %s306 = sld [smem:[#allocation2 + $0x47]]
    %v307 = vmax.f32 %v305, 0.0
    %v308 = vstv %s306
    %v309 = vmul.f32 %v308, %v307
    %v310 = vadd.f32 %v299, %v309
    %s311 = sld [smem:[#allocation2 + $0x49]]
    %s312 = sld [smem:[#allocation2 + $0x48]]
    %v313 = vstv %s312
    %v314 = vmul.f32 %v313, %v43
    %v315 = vstv %s311
    %v316 = vadd.f32 %v315, %v314
    %s317 = sld [smem:[#allocation2 + $0x4a]]
    %v318 = vmax.f32 %v316, 0.0
    %v319 = vstv %s317
    %v320 = vmul.f32 %v319, %v318
    %v321 = vadd.f32 %v310, %v320
    %s322 = sld [smem:[#allocation2 + $0x4c]]
    %s323 = sld [smem:[#allocation2 + $0x4b]]
    %v324 = vstv %s323
    %v325 = vmul.f32 %v324, %v43
    %v326 = vstv %s322
    %v327 = vadd.f32 %v326, %v325
    %s328 = sld [smem:[#allocation2 + $0x4d]]
    %v329 = vmax.f32 %v327, 0.0
    %v330 = vstv %s328
    %v331 = vmul.f32 %v330, %v329
    %v332 = vadd.f32 %v321, %v331
    %s333 = sld [smem:[#allocation2 + $0x4f]]
    %s334 = sld [smem:[#allocation2 + $0x4e]]
    %v335 = vstv %s334
    %v336 = vmul.f32 %v335, %v43
    %v337 = vstv %s333
    %v338 = vadd.f32 %v337, %v336
    %s339 = sld [smem:[#allocation2 + $0x50]]
    %v340 = vmax.f32 %v338, 0.0
    %v341 = vstv %s339
    %v342 = vmul.f32 %v341, %v340
    %v343 = vadd.f32 %v332, %v342
    %s344 = sld [smem:[#allocation2 + $0x52]]
    %s345 = sld [smem:[#allocation2 + $0x51]]
    %v346 = vstv %s345
    %v347 = vmul.f32 %v346, %v43
    %v348 = vstv %s344
    %v349 = vadd.f32 %v348, %v347
    %s350 = sld [smem:[#allocation2 + $0x53]]
    %v351 = vmax.f32 %v349, 0.0
    %v352 = vstv %s350
    %v353 = vmul.f32 %v352, %v351
    %v354 = vadd.f32 %v343, %v353
    %s355 = sld [smem:[#allocation2 + $0x55]]
    %s356 = sld [smem:[#allocation2 + $0x54]]
    %v357 = vstv %s356
    %v358 = vmul.f32 %v357, %v43
    %v359 = vstv %s355
    %v360 = vadd.f32 %v359, %v358
    %s361 = sld [smem:[#allocation2 + $0x56]]
    %v362 = vmax.f32 %v360, 0.0
    %v363 = vstv %s361
    %v364 = vmul.f32 %v363, %v362
    %v365 = vadd.f32 %v354, %v364
    %s366 = sld [smem:[#allocation2 + $0x58]]
    %s367 = sld [smem:[#allocation2 + $0x57]]
    %v368 = vstv %s367
    %v369 = vmul.f32 %v368, %v43
    %v370 = vstv %s366
    %v371 = vadd.f32 %v370, %v369
    %s372 = sld [smem:[#allocation2 + $0x59]]
    %v373 = vmax.f32 %v371, 0.0
    %v374 = vstv %s372
    %v375 = vmul.f32 %v374, %v373
    %v376 = vadd.f32 %v365, %v375
    %s377 = sld [smem:[#allocation2 + $0x5b]]
    %s378 = sld [smem:[#allocation2 + $0x5a]]
    %v379 = vstv %s378
    %v380 = vmul.f32 %v379, %v43
    %v381 = vstv %s377
    %v382 = vadd.f32 %v381, %v380
    %s383 = sld [smem:[#allocation2 + $0x5c]]
    %v384 = vmax.f32 %v382, 0.0
    %v385 = vstv %s383
    %v386 = vmul.f32 %v385, %v384
    %v387 = vadd.f32 %v376, %v386
    %s388 = sld [smem:[#allocation2 + $0x5e]]
    %s389 = sld [smem:[#allocation2 + $0x5d]]
    %v390 = vstv %s389
    %v391 = vmul.f32 %v390, %v43
    %v392 = vstv %s388
    %v393 = vadd.f32 %v392, %v391
    %s394 = sld [smem:[#allocation2 + $0x5f]]
    %v395 = vmax.f32 %v393, 0.0
    %v396 = vstv %s394
    %v397 = vmul.f32 %v396, %v395
    %v398 = vadd.f32 %v387, %v397
    %s399 = sld [smem:[#allocation4 + $0x14]]
    %v400 = vstv %s399
    %v401 = vadd.f32 %v400, 0.0
    %s402 = sld [smem:[#allocation4]]
    %s403 = sld [smem:[#allocation4 + $0x1]]
    %s404 = sld [smem:[#allocation4 + $0x2]]
    %s405 = sld [smem:[#allocation4 + $0x3]]
    %s406 = sld [smem:[#allocation4 + $0x4]]
    %v407 = vstv %s402
    %v408 = vsub.f32 %v42, %v407
    %v409 = vstv %s403
    %v410 = vmul.f32 %v408, %v409
    %v411 = vmul.f32 %v410, 0.70710677
    %v412 = vmul.f32 %v411, %v411
    %v413 = vmin.f32 16.0, %v412
    %v414 = vmul.f32 %v413, 2.1237322e-06
    %v415 = vadd.f32 %v414, 0.00028619796
    %v416 = vmul.f32 %v413, %v415
    %v417 = vadd.f32 %v416, 0.0036580483
    %v418 = vmul.f32 %v413, %v417
    %v419 = vadd.f32 %v418, 0.05243302
    %v420 = vmul.f32 %v413, %v419
    %v421 = vadd.f32 %v420, 0.18741608
    %v422 = vmul.f32 %v413, %v421
    %v423 = vadd.f32 %v422, 1.1283791
    %v424 = vmul.f32 %v411, %v423
    %v425 = vmul.f32 %v413, 3.8918573e-05
    %v426 = vadd.f32 %v425, 0.001143296
    %v427 = vmul.f32 %v413, %v426
    %v428 = vadd.f32 %v427, 0.014752088
    %v429 = vmul.f32 %v413, %v428
    %v430 = vadd.f32 %v429, 0.112945676
    %v431 = vmul.f32 %v413, %v430
    %v432 = vadd.f32 %v431, 0.4994258
    %v433 = vmul.f32 %v413, %v432
    %v434 = vadd.f32 %v433, 1.0
    %v435 = vrcp.pop %v434
    %v436 = vmul.f32 %v434, %v435
    %v437 = vsub.f32 1.0, %v436
    %v438 = vmul.f32 %v435, %v437
    %v439 = vadd.f32 %v435, %v438
    %vm440 = vweird.f32 %v434
    %vm441 = vweird.f32 %v435
    %vm442 = vmor %vm440, %vm441
    %v443 = vsel %vm442, %v435, %v439
    %v444 = vand.u32 2147483647, %v434
    %vm445 = vcmp.eq.f32.partialorder %v444, 8.507059e+37
    %v446 = vand.u32 %v434, 2147483648
    %v447 = vor.u32 1.1754944e-38, %v446
    %v448 = vsel %vm445, %v447, %v443
    %v449 = vmul.f32 %v424, %v448
    %v450 = vmin.f32 %v449, 1.0
    %v451 = vmax.f32 %v450, -1.0
    %v452 = vstv %s404
    %v453 = vmul.f32 %v452, %v451
    %v454 = vadd.f32 %v401, %v453
    %v455 = vmul.f32 %v410, %v410
    %v456 = vmul.f32 %v455, 0.5
    %v457 = vstv %s406
    %v458 = vsub.f32 %v457, %v456
    %v459 = vmax.f32 %v458, -12.0
    %v460 = vmin.f32 %v459, 12.0
    %v461 = vmul.f32 %v460, 1.442695
    %v462 = vpow.pop %v461
    %v463 = vstv %s405
    %v464 = vmul.f32 %v463, %v462
    %v465 = vadd.f32 %v464, 0.0
    %s466 = sld [smem:[#allocation4 + $0x5]]
    %s467 = sld [smem:[#allocation4 + $0x6]]
    %s468 = sld [smem:[#allocation4 + $0x7]]
    %s469 = sld [smem:[#allocation4 + $0x8]]
    %s470 = sld [smem:[#allocation4 + $0x9]]
    %v471 = vstv %s466
    %v472 = vsub.f32 %v42, %v471
    %v473 = vstv %s467
    %v474 = vmul.f32 %v472, %v473
    %v475 = vmul.f32 %v474, 0.70710677
    %v476 = vmul.f32 %v475, %v475
    %v477 = vmin.f32 16.0, %v476
    %v478 = vmul.f32 %v477, 2.1237322e-06
    %v479 = vadd.f32 %v478, 0.00028619796
    %v480 = vmul.f32 %v477, %v479
    %v481 = vadd.f32 %v480, 0.0036580483
    %v482 = vmul.f32 %v477, %v481
    %v483 = vadd.f32 %v482, 0.05243302
    %v484 = vmul.f32 %v477, %v483
    %v485 = vadd.f32 %v484, 0.18741608
    %v486 = vmul.f32 %v477, %v485
    %v487 = vadd.f32 %v486, 1.1283791
    %v488 = vmul.f32 %v475, %v487
    %v489 = vmul.f32 %v477, 3.8918573e-05
    %v490 = vadd.f32 %v489, 0.001143296
    %v491 = vmul.f32 %v477, %v490
    %v492 = vadd.f32 %v491, 0.014752088
    %v493 = vmul.f32 %v477, %v492
    %v494 = vadd.f32 %v493, 0.112945676
    %v495 = vmul.f32 %v477, %v494
    %v496 = vadd.f32 %v495, 0.4994258
    %v497 = vmul.f32 %v477, %v496
    %v498 = vadd.f32 %v497, 1.0
    %v499 = vrcp.pop %v498
    %v500 = vmul.f32 %v498, %v499
    %v501 = vsub.f32 1.0, %v500
    %v502 = vmul.f32 %v499, %v501
    %v503 = vadd.f32 %v499, %v502
    %vm504 = vweird.f32 %v498
    %vm505 = vweird.f32 %v499
    %vm506 = vmor %vm504, %vm505
    %v507 = vsel %vm506, %v499, %v503
    %v508 = vand.u32 2147483647, %v498
    %vm509 = vcmp.eq.f32.partialorder %v508, 8.507059e+37
    %v510 = vand.u32 %v498, 2147483648
    %v511 = vor.u32 1.1754944e-38, %v510
    %v512 = vsel %vm509, %v511, %v507
    %v513 = vmul.f32 %v488, %v512
    %v514 = vmin.f32 %v513, 1.0
    %v515 = vmax.f32 %v514, -1.0
    %v516 = vstv %s468
    %v517 = vmul.f32 %v516, %v515
    %v518 = vadd.f32 %v454, %v517
    %v519 = vmul.f32 %v474, %v474
    %v520 = vmul.f32 %v519, 0.5
    %v521 = vstv %s470
    %v522 = vsub.f32 %v521, %v520
    %v523 = vmax.f32 %v522, -12.0
    %v524 = vmin.f32 %v523, 12.0
    %v525 = vmul.f32 %v524, 1.442695
    %v526 = vpow.pop %v525
    %v527 = vstv %s469
    %v528 = vmul.f32 %v527, %v526
    %v529 = vadd.f32 %v465, %v528
    %s530 = sld [smem:[#allocation4 + $0xa]]
    %s531 = sld [smem:[#allocation4 + $0xb]]
    %s532 = sld [smem:[#allocation4 + $0xc]]
    %s533 = sld [smem:[#allocation4 + $0xd]]
    %s534 = sld [smem:[#allocation4 + $0xe]]
    %v535 = vstv %s530
    %v536 = vsub.f32 %v42, %v535
    %v537 = vstv %s531
    %v538 = vmul.f32 %v536, %v537
    %v539 = vmul.f32 %v538, 0.70710677
    %v540 = vmul.f32 %v539, %v539
    %v541 = vmin.f32 16.0, %v540
    %v542 = vmul.f32 %v541, 2.1237322e-06
    %v543 = vadd.f32 %v542, 0.00028619796
    %v544 = vmul.f32 %v541, %v543
    %v545 = vadd.f32 %v544, 0.0036580483
    %v546 = vmul.f32 %v541, %v545
    %v547 = vadd.f32 %v546, 0.05243302
    %v548 = vmul.f32 %v541, %v547
    %v549 = vadd.f32 %v548, 0.18741608
    %v550 = vmul.f32 %v541, %v549
    %v551 = vadd.f32 %v550, 1.1283791
    %v552 = vmul.f32 %v539, %v551
    %v553 = vmul.f32 %v541, 3.8918573e-05
    %v554 = vadd.f32 %v553, 0.001143296
    %v555 = vmul.f32 %v541, %v554
    %v556 = vadd.f32 %v555, 0.014752088
    %v557 = vmul.f32 %v541, %v556
    %v558 = vadd.f32 %v557, 0.112945676
    %v559 = vmul.f32 %v541, %v558
    %v560 = vadd.f32 %v559, 0.4994258
    %v561 = vmul.f32 %v541, %v560
    %v562 = vadd.f32 %v561, 1.0
    %v563 = vrcp.pop %v562
    %v564 = vmul.f32 %v562, %v563
    %v565 = vsub.f32 1.0, %v564
    %v566 = vmul.f32 %v563, %v565
    %v567 = vadd.f32 %v563, %v566
    %vm568 = vweird.f32 %v562
    %vm569 = vweird.f32 %v563
    %vm570 = vmor %vm568, %vm569
    %v571 = vsel %vm570, %v563, %v567
    %v572 = vand.u32 2147483647, %v562
    %vm573 = vcmp.eq.f32.partialorder %v572, 8.507059e+37
    %v574 = vand.u32 %v562, 2147483648
    %v575 = vor.u32 1.1754944e-38, %v574
    %v576 = vsel %vm573, %v575, %v571
    %v577 = vmul.f32 %v552, %v576
    %v578 = vmin.f32 %v577, 1.0
    %v579 = vmax.f32 %v578, -1.0
    %v580 = vstv %s532
    %v581 = vmul.f32 %v580, %v579
    %v582 = vadd.f32 %v518, %v581
    %v583 = vmul.f32 %v538, %v538
    %v584 = vmul.f32 %v583, 0.5
    %v585 = vstv %s534
    %v586 = vsub.f32 %v585, %v584
    %v587 = vmax.f32 %v586, -12.0
    %v588 = vmin.f32 %v587, 12.0
    %v589 = vmul.f32 %v588, 1.442695
    %v590 = vpow.pop %v589
    %v591 = vstv %s533
    %v592 = vmul.f32 %v591, %v590
    %v593 = vadd.f32 %v529, %v592
    %s594 = sld [smem:[#allocation4 + $0xf]]
    %s595 = sld [smem:[#allocation4 + $0x10]]
    %s596 = sld [smem:[#allocation4 + $0x11]]
    %s597 = sld [smem:[#allocation4 + $0x12]]
    %s598 = sld [smem:[#allocation4 + $0x13]]
    %v599 = vstv %s594
    %v600 = vsub.f32 %v42, %v599
    %v601 = vstv %s595
    %v602 = vmul.f32 %v600, %v601
    %v603 = vmul.f32 %v602, 0.70710677
    %v604 = vmul.f32 %v603, %v603
    %v605 = vmin.f32 16.0, %v604
    %v606 = vmul.f32 %v605, 2.1237322e-06
    %v607 = vadd.f32 %v606, 0.00028619796
    %v608 = vmul.f32 %v605, %v607
    %v609 = vadd.f32 %v608, 0.0036580483
    %v610 = vmul.f32 %v605, %v609
    %v611 = vadd.f32 %v610, 0.05243302
    %v612 = vmul.f32 %v605, %v611
    %v613 = vadd.f32 %v612, 0.18741608
    %v614 = vmul.f32 %v605, %v613
    %v615 = vadd.f32 %v614, 1.1283791
    %v616 = vmul.f32 %v603, %v615
    %v617 = vmul.f32 %v605, 3.8918573e-05
    %v618 = vadd.f32 %v617, 0.001143296
    %v619 = vmul.f32 %v605, %v618
    %v620 = vadd.f32 %v619, 0.014752088
    %v621 = vmul.f32 %v605, %v620
    %v622 = vadd.f32 %v621, 0.112945676
    %v623 = vmul.f32 %v605, %v622
    %v624 = vadd.f32 %v623, 0.4994258
    %v625 = vmul.f32 %v605, %v624
    %v626 = vadd.f32 %v625, 1.0
    %v627 = vrcp.pop %v626
    %v628 = vmul.f32 %v626, %v627
    %v629 = vsub.f32 1.0, %v628
    %v630 = vmul.f32 %v627, %v629
    %v631 = vadd.f32 %v627, %v630
    %vm632 = vweird.f32 %v626
    %vm633 = vweird.f32 %v627
    %vm634 = vmor %vm632, %vm633
    %v635 = vsel %vm634, %v627, %v631
    %v636 = vand.u32 2147483647, %v626
    %vm637 = vcmp.eq.f32.partialorder %v636, 8.507059e+37
    %v638 = vand.u32 %v626, 2147483648
    %v639 = vor.u32 1.1754944e-38, %v638
    %v640 = vsel %vm637, %v639, %v635
    %v641 = vmul.f32 %v616, %v640
    %v642 = vmin.f32 %v641, 1.0
    %v643 = vmax.f32 %v642, -1.0
    %v644 = vstv %s596
    %v645 = vmul.f32 %v644, %v643
    %v646 = vadd.f32 %v582, %v645
    %v647 = vmul.f32 %v602, %v602
    %v648 = vmul.f32 %v647, 0.5
    %v649 = vstv %s598
    %v650 = vsub.f32 %v649, %v648
    %v651 = vmax.f32 %v650, -12.0
    %v652 = vmin.f32 %v651, 12.0
    %v653 = vmul.f32 %v652, 1.442695
    %v654 = vpow.pop %v653
    %v655 = vstv %s597
    %v656 = vmul.f32 %v655, %v654
    %v657 = vadd.f32 %v593, %v656
    %v658 = vmax.f32 %v646, 1e-06
    %v659 = vmin.f32 %v658, 0.999999
    %v660 = vlog2.pop %v659
    %v661 = vmul.f32 %v660, 0.6931472
    %v662 = vsub.f32 1.0, %v659
    %v663 = vlog2.pop %v662
    %v664 = vmul.f32 %v663, 0.6931472
    %v665 = vsub.f32 %v661, %v664
    %v666 = vsub.f32 %v665, %v398
    %v667 = vmul.f32 %v666, %v666
    %v668 = vmul.f32 %v667, -0.5
    %v669 = vsub.f32 %v668, 0.9189385
    %v670 = vlog2.pop %v657
    %v671 = vmul.f32 %v670, 0.6931472
    %v672 = vadd.f32 %v661, %v664
    %v673 = vsub.f32 %v671, %v672
    %v674 = vadd.f32 %v669, %v673
    %675 = vst [vmem:[%s4] sm:$0xff] %v674
    %s676 = scalar_lea.vmem %s4, 8
    %677 = vst [vmem:[%s676] sm:$0xff] %v666
    %s678 = scalar_lea.vmem %s4, 16
    %679 = vst [vmem:[%s678] sm:$0xff] %v669
    %s680 = scalar_lea.vmem %s4, 24
    %681 = vst [vmem:[%s680] sm:$0xff] %v673
    // Predicated region
    $region26: #{cdf_flow_forward.1} parent=1 // pred_check
      _
    $region27: #{cdf_flow_forward.1} parent=1 // pred_check_branch
      %683 = sbr.rel (0) target = $region29
    $region28: #{cdf_flow_forward.1} parent=1 // pred_region
      _
    $region29: #{cdf_flow_forward.1} parent=1 // pred_fallthru
      _
    // Predicated region
    $region30: #{cdf_flow_forward.1} parent=1 // pred_check
      _
    $region31: #{cdf_flow_forward.1} parent=1 // pred_check_branch
      %685 = sbr.rel (0) target = $region33
    $region32: #{cdf_flow_forward.1} parent=1 // pred_region
      _
    $region33: #{cdf_flow_forward.1} parent=1 // pred_fallthru
      _
    %686 = vsyncpa [#allocation3], 1
    %687 = vsyncpa [#allocation5], 1

</llo_original>
